<compile_context>
chip_gen: v6e
topology: v6e:2x2x1
jax: 0.10.0
libtpu: 0.0.40
codegen_flags: <defaults>
</compile_context>

<pallas_src>
import functools

import jax
import jax.numpy as jnp
from jax import lax
from jax.experimental import pallas as pl
from jax.experimental.pallas import tpu as pltpu


def _bilstm_kernel(xx_ref,    # [T*Bp, 2D]   bf16  row t*Bp+b = [x[t,b] | x[T-1-t,b]]
                   wx_ref,    # [2D, 8H]     bf16  reordered gate lanes, g-gate x2
                   bx_ref,    # [1, 8H]      f32   b_ih+b_hh, reordered, g-gate x2
                   whh_ref,   # [2H, 8H]     bf16  block-diagonal recurrent weights
                   wlin_ref,  # [2H, Opad]   bf16
                   blin_ref,  # [1, Opad]    f32
                   out_ref,   # [T*Bp, Opad] f32
                   gx_ref,    # scratch [T*Bp, 8H] f32
                   hs_ref,    # scratch [T*Bp, 2H] bf16  [h_fwd | h_bwd], orig time
                   *, T, Bp, H):
    H2 = 2 * H

    # ---- Prologue: input projection + bias for both directions and all
    # timesteps in one lane-dense (8H = 256) MXU call.  Gate lane layout is
    # (i_f, i_b, f_f, f_b, g_f, g_b, o_f, o_b); the backward half of each row
    # already corresponds to time T-1-t, so the recurrence reads a single
    # contiguous [Bp, 8H] block per step.
    gx_ref[...] = (
        jnp.dot(xx_ref[...], wx_ref[...], preferred_element_type=jnp.float32)
        + bx_ref[...])

    whh = whh_ref[...]

    def step(i, carry):
        h, c = carry                     # h [Bp,2H] bf16 = [h_f|h_b]; c f32
        rf = pl.multiple_of(i * Bp, Bp)            # forward timestep i
        rb = pl.multiple_of((T - 1 - i) * Bp, Bp)  # backward timestep T-1-i

        # Single fused recurrent matmul for both directions (256-wide MXU
        # push); block-diagonal whh keeps the directions independent.
        gates = gx_ref[pl.ds(rf, Bp), :] + jnp.dot(
            h, whh, preferred_element_type=jnp.float32)       # [Bp, 8H] f32

        # One full-width sigmoid; tanh(g) = 2*sigmoid(2g) - 1 (g-gate weights
        # and bias were pre-scaled by 2 in the wrapper), so no tanh(gates).
        sig = jax.nn.sigmoid(gates)
        i_g = sig[:, 0:H2]                       # (i_f | i_b)
        f_g = sig[:, H2:2 * H2]                  # (f_f | f_b)
        g_t = 2.0 * sig[:, 2 * H2:3 * H2] - 1.0  # (tanh(g_f) | tanh(g_b))
        o_g = sig[:, 3 * H2:]                    # (o_f | o_b)

        c = f_g * c + i_g * g_t                  # [Bp, 2H] f32
        h = (o_g * jnp.tanh(c)).astype(jnp.bfloat16)

        # Store: forward half at time i, backward half re-reversed to T-1-i.
        hs_ref[pl.ds(rf, Bp), 0:H] = h[:, 0:H]
        hs_ref[pl.ds(rb, Bp), H:H2] = h[:, H:H2]
        return (h, c)

    lax.fori_loop(0, T, step,
                  (jnp.zeros((Bp, H2), jnp.bfloat16),
                   jnp.zeros((Bp, H2), jnp.float32)),
                  unroll=True)

    # ---- Epilogue: Linear on concat([h_fwd, h_bwd]) as a single K=2H matmul,
    # lane-dense (Opad = 128) unmasked output store.
    out_ref[...] = (
        jnp.dot(hs_ref[...], wlin_ref[...], preferred_element_type=jnp.float32)
        + blin_ref[...])


def _reorder_gates(w_f, w_b, H, g_scale=2.0):
    """Interleave fwd/bwd gate blocks along the last axis:
    (i,f,g,o) per direction -> (i_f,i_b,f_f,f_b,g_f,g_b,o_f,o_b),
    scaling the g-gate blocks so tanh(g) = 2*sigmoid(2g)-1 in the kernel."""
    blocks = []
    for g in range(4):
        s = g_scale if g == 2 else 1.0
        blocks.append(s * w_f[..., g * H:(g + 1) * H])
        blocks.append(s * w_b[..., g * H:(g + 1) * H])
    return jnp.concatenate(blocks, axis=-1)


def bidirectional_lstm_forward(x, params):
    """x: [B, T, input_size] float32 -> [B, T, output_size] float32."""
    B, T, D = x.shape
    H = params["w_hh_f"].shape[1]
    O = params["w_lin"].shape[0]

    Bp = ((B + 7) // 8) * 8          # pad batch to full sublanes
    Opad = ((O + 127) // 128) * 128  # pad output to full lanes

    # batch-first -> time-major (padded); each row carries the forward-time
    # input and the backward-time input side by side so the kernel prologue
    # is a single matmul and the recurrence reads contiguous gx rows.
    x_p = jnp.pad(x.astype(jnp.float32), ((0, Bp - B), (0, 0), (0, 0)))
    xt = jnp.transpose(x_p, (1, 0, 2))                     # [T, Bp, D]
    xx = jnp.concatenate([xt, xt[::-1]], axis=-1)          # [T, Bp, 2D]
    xx = xx.reshape(T * Bp, 2 * D).astype(jnp.bfloat16)

    # ---- weights: pre-transposed, gate lanes reordered, g-gate pre-scaled x2
    wih_f_t = params["w_ih_f"].T                           # [D, 4H]
    wih_b_t = params["w_ih_b"].T
    zD = jnp.zeros((D, 4 * H), jnp.float32)
    wx = jnp.concatenate(
        [_reorder_gates(wih_f_t, zD, H),                   # rows 0:D  -> fwd lanes
         _reorder_gates(zD, wih_b_t, H)],                  # rows D:2D -> bwd lanes
        axis=0).astype(jnp.bfloat16)                       # [2D, 8H]

    b_f = (params["b_ih_f"] + params["b_hh_f"])[None, :]
    b_b = (params["b_ih_b"] + params["b_hh_b"])[None, :]
    bx = _reorder_gates(b_f, b_b, H).astype(jnp.float32)   # [1, 8H]

    zH = jnp.zeros((H, 4 * H), jnp.float32)
    whh = jnp.concatenate(
        [_reorder_gates(params["w_hh_f"].T, zH, H),        # rows 0:H  (h_fwd)
         _reorder_gates(zH, params["w_hh_b"].T, H)],       # rows H:2H (h_bwd)
        axis=0).astype(jnp.bfloat16)                       # [2H, 8H] block-diag

    wlin = jnp.pad(params["w_lin"].T, ((0, 0), (0, Opad - O))) \
              .astype(jnp.bfloat16)                        # [2H, Opad]
    blin = jnp.pad(params["b_lin"], (0, Opad - O)).reshape(1, Opad) \
              .astype(jnp.float32)

    vmem = pl.BlockSpec(memory_space=pltpu.MemorySpace.VMEM)
    kernel = functools.partial(_bilstm_kernel, T=T, Bp=Bp, H=H)
    # TODO(synk): for non-toy T, tile xx/gx/out over time chunks with a grid
    # ("arbitrary" time axis, h/c in persistent VMEM scratch) and store gx in
    # bf16; whole-array VMEM residency is only appropriate at these sizes.
    out2d = pl.pallas_call(
        kernel,
        out_shape=jax.ShapeDtypeStruct((T * Bp, Opad), jnp.float32),
        in_specs=[vmem] * 6,
        out_specs=vmem,
        scratch_shapes=[pltpu.VMEM((T * Bp, 8 * H), jnp.float32),
                        pltpu.VMEM((T * Bp, 2 * H), jnp.bfloat16)],
    )(xx, wx, bx, whh, wlin, blin)

    out = out2d.reshape(T, Bp, Opad)[:, :B, :O]
    return jnp.transpose(out, (1, 0, 2))                   # [B, T, O]


# ----------------------------- parameters -----------------------------------

def init_params(key, input_size, hidden_size, output_size):
    H = hidden_size
    k_rnn = 1.0 / (H ** 0.5)
    k_lin = 1.0 / ((2 * H) ** 0.5)
    keys = jax.random.split(key, 10)
    u = lambda kk, shape, bound: jax.random.uniform(
        kk, shape, jnp.float32, -bound, bound)
    return {
        # PyTorch-shaped LSTM params, gate order (i, f, g, o).
        "w_ih_f": u(keys[0], (4 * H, input_size), k_rnn),
        "w_hh_f": u(keys[1], (4 * H, H), k_rnn),
        "b_ih_f": u(keys[2], (4 * H,), k_rnn),
        "b_hh_f": u(keys[3], (4 * H,), k_rnn),
        "w_ih_b": u(keys[4], (4 * H, input_size), k_rnn),
        "w_hh_b": u(keys[5], (4 * H, H), k_rnn),
        "b_ih_b": u(keys[6], (4 * H,), k_rnn),
        "b_hh_b": u(keys[7], (4 * H,), k_rnn),
        # nn.Linear(hidden_size * 2, output_size)
        "w_lin": u(keys[8], (output_size, 2 * H), k_lin),
        "b_lin": u(keys[9], (output_size,), k_lin),
    }


# -------------------------- pure-JAX reference -------------------------------

def _lstm_dir_ref(x, w_ih, w_hh, b_ih, b_hh):
    B, T, D = x.shape
    H = w_hh.shape[1]
    h = jnp.zeros((B, H), jnp.float32)
    c = jnp.zeros((B, H), jnp.float32)
    outs = []
    for t in range(T):
        gates = x[:, t] @ w_ih.T + h @ w_hh.T + b_ih + b_hh
        i_g = jax.nn.sigmoid(gates[:, :H])
        f_g = jax.nn.sigmoid(gates[:, H:2 * H])
        g_g = jnp.tanh(gates[:, 2 * H:3 * H])
        o_g = jax.nn.sigmoid(gates[:, 3 * H:])
        c = f_g * c + i_g * g_g
        h = o_g * jnp.tanh(c)
        outs.append(h)
    return jnp.stack(outs, axis=1)


def ref_forward(x, p):
    fwd = _lstm_dir_ref(x, p["w_ih_f"], p["w_hh_f"], p["b_ih_f"], p["b_hh_f"])
    bwd = _lstm_dir_ref(x[:, ::-1], p["w_ih_b"], p["w_hh_b"],
                        p["b_ih_b"], p["b_hh_b"])[:, ::-1]
    rnn = jnp.concatenate([fwd, bwd], axis=-1)
    return rnn @ p["w_lin"].T + p["b_lin"]


# ---------------------------------- main -------------------------------------

if __name__ == "__main__":
    B, T, INPUT_SIZE, HIDDEN_SIZE, OUTPUT_SIZE = 2, 8, 16, 32, 16

    key = jax.random.PRNGKey(0)
    k_x, k_p = jax.random.split(key)
    x = jax.random.normal(k_x, (B, T, INPUT_SIZE), dtype=jnp.float32)
    params = init_params(k_p, INPUT_SIZE, HIDDEN_SIZE, OUTPUT_SIZE)

    out = bidirectional_lstm_forward(x, params)
    out = jax.block_until_ready(out)

    expected = ref_forward(x, params)   # f32 reference
    assert out.shape == (B, T, OUTPUT_SIZE), out.shape
    # Tolerance reflects bf16 matmul operands (f32 accumulation / f32 cell
    # state); structural errors (gate order, bias, reversal, lane reorder)
    # would be >> this.
    assert jnp.allclose(out, expected, rtol=2e-2, atol=2e-2), (
        float(jnp.max(jnp.abs(out - expected))))

    print("KERNEL_OK")
</pallas_src>

<mosaic_0001>
module attributes {stable_mosaic.version = 11 : i64} {
  func.func @_bilstm_kernel(%arg0: memref<64x32xbf16, #tpu.memory_space<vmem>>, %arg1: memref<32x256xbf16, #tpu.memory_space<vmem>>, %arg2: memref<1x256xf32, #tpu.memory_space<vmem>>, %arg3: memref<64x256xbf16, #tpu.memory_space<vmem>>, %arg4: memref<64x128xbf16, #tpu.memory_space<vmem>>, %arg5: memref<1x128xf32, #tpu.memory_space<vmem>>, %arg6: memref<64x128xf32, #tpu.memory_space<vmem>>, %arg7: memref<64x256xf32, #tpu.memory_space<vmem>>, %arg8: memref<64x64xbf16, #tpu.memory_space<vmem>>) attributes {dimension_semantics = [], scalar_prefetch = 0 : i64, scratch_operands = 2 : i64, tpu.core_type = #tpu.core_type<tc>} {
    %c0 = arith.constant 0 : index
    %c0_0 = arith.constant 0 : index
    %0 = vector.load %arg0[%c0, %c0_0] : memref<64x32xbf16, #tpu.memory_space<vmem>>, vector<64x32xbf16>
    %c0_1 = arith.constant 0 : index
    %c0_2 = arith.constant 0 : index
    %1 = vector.load %arg1[%c0_1, %c0_2] : memref<32x256xbf16, #tpu.memory_space<vmem>>, vector<32x256xbf16>
    %cst = arith.constant dense<0.000000e+00> : vector<64x256xf32>
    %2 = tpu.matmul %0, %1, %cst {dimension_numbers = #tpu.dot_dimension_numbers<[1], [0], [0], [1], [0, 0, 1, 1], [], []>} : vector<64x32xbf16>, vector<32x256xbf16>, vector<64x256xf32> -> vector<64x256xf32>
    %c0_3 = arith.constant 0 : index
    %c0_4 = arith.constant 0 : index
    %3 = vector.load %arg2[%c0_3, %c0_4] : memref<1x256xf32, #tpu.memory_space<vmem>>, vector<1x256xf32>
    %4 = vector.broadcast %3 : vector<1x256xf32> to vector<64x256xf32>
    %5 = arith.addf %2, %4 : vector<64x256xf32>
    %c0_5 = arith.constant 0 : index
    %c0_6 = arith.constant 0 : index
    %6 = vector.load %arg7[%c0_5, %c0_6] : memref<64x256xf32, #tpu.memory_space<vmem>>, vector<64x256xf32>
    tpu.vector_store %arg7[%c0_5, %c0_6], %5 {strides = array<i32>} : memref<64x256xf32, #tpu.memory_space<vmem>>, vector<64x256xf32>,
    %c0_7 = arith.constant 0 : index
    %c0_8 = arith.constant 0 : index
    %7 = vector.load %arg3[%c0_7, %c0_8] : memref<64x256xbf16, #tpu.memory_space<vmem>>, vector<64x256xbf16>
    %cst_9 = arith.constant 0.000000e+00 : bf16
    %8 = vector.broadcast %cst_9 : bf16 to vector<8x64xbf16>
    %cst_10 = arith.constant 0.000000e+00 : f32
    %9 = vector.broadcast %cst_10 : f32 to vector<8x64xf32>
    %c0_i32 = arith.constant 0 : i32
    %c8_i32 = arith.constant 8 : i32
    %10 = arith.muli %c0_i32, %c8_i32 : i32
    %11 = tpu.assume_multiple %10, 8 : i32
    %c7_i32 = arith.constant 7 : i32
    %12 = arith.subi %c7_i32, %c0_i32 : i32
    %c8_i32_11 = arith.constant 8 : i32
    %13 = arith.muli %12, %c8_i32_11 : i32
    %14 = tpu.assume_multiple %13, 8 : i32
    %15 = arith.index_cast %11 : i32 to index
    %c0_12 = arith.constant 0 : index
    %16 = vector.load %arg7[%15, %c0_12] : memref<64x256xf32, #tpu.memory_space<vmem>>, vector<8x256xf32>
    %cst_13 = arith.constant dense<0.000000e+00> : vector<8x256xf32>
    %17 = tpu.matmul %8, %7, %cst_13 {dimension_numbers = #tpu.dot_dimension_numbers<[1], [0], [0], [1], [0, 0, 1, 1], [], []>} : vector<8x64xbf16>, vector<64x256xbf16>, vector<8x256xf32> -> vector<8x256xf32>
    %18 = arith.addf %16, %17 : vector<8x256xf32>
    %19 = arith.negf %18 : vector<8x256xf32>
    %20 = math.exp %19 : vector<8x256xf32>
    %cst_14 = arith.constant 1.000000e+00 : f32
    %21 = vector.broadcast %cst_14 : f32 to vector<8x256xf32>
    %22 = arith.addf %21, %20 : vector<8x256xf32>
    %23 = arith.divf %21, %22 : vector<8x256xf32>
    %24 = vector.extract_strided_slice %23 {offsets = [0, 0], sizes = [8, 64], strides = [1, 1]} : vector<8x256xf32> to vector<8x64xf32>
    %25 = vector.extract_strided_slice %23 {offsets = [0, 64], sizes = [8, 64], strides = [1, 1]} : vector<8x256xf32> to vector<8x64xf32>
    %26 = vector.extract_strided_slice %23 {offsets = [0, 128], sizes = [8, 64], strides = [1, 1]} : vector<8x256xf32> to vector<8x64xf32>
    %cst_15 = arith.constant 2.000000e+00 : f32
    %27 = vector.broadcast %cst_15 : f32 to vector<8x64xf32>
    %28 = arith.mulf %27, %26 : vector<8x64xf32>
    %cst_16 = arith.constant 1.000000e+00 : f32
    %29 = vector.broadcast %cst_16 : f32 to vector<8x64xf32>
    %30 = arith.subf %28, %29 : vector<8x64xf32>
    %31 = vector.extract_strided_slice %23 {offsets = [0, 192], sizes = [8, 64], strides = [1, 1]} : vector<8x256xf32> to vector<8x64xf32>
    %32 = arith.mulf %25, %9 : vector<8x64xf32>
    %33 = arith.mulf %24, %30 : vector<8x64xf32>
    %34 = arith.addf %32, %33 : vector<8x64xf32>
    %35 = math.tanh %34 : vector<8x64xf32>
    %36 = arith.mulf %31, %35 : vector<8x64xf32>
    %37 = arith.truncf %36 : vector<8x64xf32> to vector<8x64xbf16>
    %38 = vector.extract_strided_slice %37 {offsets = [0, 0], sizes = [8, 32], strides = [1, 1]} : vector<8x64xbf16> to vector<8x32xbf16>
    %39 = arith.index_cast %11 : i32 to index
    %c0_17 = arith.constant 0 : index
    %40 = vector.load %arg8[%39, %c0_17] : memref<64x64xbf16, #tpu.memory_space<vmem>>, vector<8x32xbf16>
    tpu.vector_store %arg8[%39, %c0_17], %38 {strides = array<i32>} : memref<64x64xbf16, #tpu.memory_space<vmem>>, vector<8x32xbf16>,
    %41 = vector.extract_strided_slice %37 {offsets = [0, 32], sizes = [8, 32], strides = [1, 1]} : vector<8x64xbf16> to vector<8x32xbf16>
    %42 = arith.index_cast %14 : i32 to index
    %c32 = arith.constant 32 : index
    %43 = vector.load %arg8[%42, %c32] : memref<64x64xbf16, #tpu.memory_space<vmem>>, vector<8x32xbf16>
    tpu.vector_store %arg8[%42, %c32], %41 {strides = array<i32>} : memref<64x64xbf16, #tpu.memory_space<vmem>>, vector<8x32xbf16>,
    %c1_i32 = arith.constant 1 : i32
    %c8_i32_18 = arith.constant 8 : i32
    %44 = arith.muli %c1_i32, %c8_i32_18 : i32
    %45 = tpu.assume_multiple %44, 8 : i32
    %c7_i32_19 = arith.constant 7 : i32
    %46 = arith.subi %c7_i32_19, %c1_i32 : i32
    %c8_i32_20 = arith.constant 8 : i32
    %47 = arith.muli %46, %c8_i32_20 : i32
    %48 = tpu.assume_multiple %47, 8 : i32
    %49 = arith.index_cast %45 : i32 to index
    %c0_21 = arith.constant 0 : index
    %50 = vector.load %arg7[%49, %c0_21] : memref<64x256xf32, #tpu.memory_space<vmem>>, vector<8x256xf32>
    %cst_22 = arith.constant dense<0.000000e+00> : vector<8x256xf32>
    %51 = tpu.matmul %37, %7, %cst_22 {dimension_numbers = #tpu.dot_dimension_numbers<[1], [0], [0], [1], [0, 0, 1, 1], [], []>} : vector<8x64xbf16>, vector<64x256xbf16>, vector<8x256xf32> -> vector<8x256xf32>
    %52 = arith.addf %50, %51 : vector<8x256xf32>
    %53 = arith.negf %52 : vector<8x256xf32>
    %54 = math.exp %53 : vector<8x256xf32>
    %cst_23 = arith.constant 1.000000e+00 : f32
    %55 = vector.broadcast %cst_23 : f32 to vector<8x256xf32>
    %56 = arith.addf %55, %54 : vector<8x256xf32>
    %57 = arith.divf %55, %56 : vector<8x256xf32>
    %58 = vector.extract_strided_slice %57 {offsets = [0, 0], sizes = [8, 64], strides = [1, 1]} : vector<8x256xf32> to vector<8x64xf32>
    %59 = vector.extract_strided_slice %57 {offsets = [0, 64], sizes = [8, 64], strides = [1, 1]} : vector<8x256xf32> to vector<8x64xf32>
    %60 = vector.extract_strided_slice %57 {offsets = [0, 128], sizes = [8, 64], strides = [1, 1]} : vector<8x256xf32> to vector<8x64xf32>
    %cst_24 = arith.constant 2.000000e+00 : f32
    %61 = vector.broadcast %cst_24 : f32 to vector<8x64xf32>
    %62 = arith.mulf %61, %60 : vector<8x64xf32>
    %cst_25 = arith.constant 1.000000e+00 : f32
    %63 = vector.broadcast %cst_25 : f32 to vector<8x64xf32>
    %64 = arith.subf %62, %63 : vector<8x64xf32>
    %65 = vector.extract_strided_slice %57 {offsets = [0, 192], sizes = [8, 64], strides = [1, 1]} : vector<8x256xf32> to vector<8x64xf32>
    %66 = arith.mulf %59, %34 : vector<8x64xf32>
    %67 = arith.mulf %58, %64 : vector<8x64xf32>
    %68 = arith.addf %66, %67 : vector<8x64xf32>
    %69 = math.tanh %68 : vector<8x64xf32>
    %70 = arith.mulf %65, %69 : vector<8x64xf32>
    %71 = arith.truncf %70 : vector<8x64xf32> to vector<8x64xbf16>
    %72 = vector.extract_strided_slice %71 {offsets = [0, 0], sizes = [8, 32], strides = [1, 1]} : vector<8x64xbf16> to vector<8x32xbf16>
    %73 = arith.index_cast %45 : i32 to index
    %c0_26 = arith.constant 0 : index
    %74 = vector.load %arg8[%73, %c0_26] : memref<64x64xbf16, #tpu.memory_space<vmem>>, vector<8x32xbf16>
    tpu.vector_store %arg8[%73, %c0_26], %72 {strides = array<i32>} : memref<64x64xbf16, #tpu.memory_space<vmem>>, vector<8x32xbf16>,
    %75 = vector.extract_strided_slice %71 {offsets = [0, 32], sizes = [8, 32], strides = [1, 1]} : vector<8x64xbf16> to vector<8x32xbf16>
    %76 = arith.index_cast %48 : i32 to index
    %c32_27 = arith.constant 32 : index
    %77 = vector.load %arg8[%76, %c32_27] : memref<64x64xbf16, #tpu.memory_space<vmem>>, vector<8x32xbf16>
    tpu.vector_store %arg8[%76, %c32_27], %75 {strides = array<i32>} : memref<64x64xbf16, #tpu.memory_space<vmem>>, vector<8x32xbf16>,
    %c2_i32 = arith.constant 2 : i32
    %c8_i32_28 = arith.constant 8 : i32
    %78 = arith.muli %c2_i32, %c8_i32_28 : i32
    %79 = tpu.assume_multiple %78, 8 : i32
    %c7_i32_29 = arith.constant 7 : i32
    %80 = arith.subi %c7_i32_29, %c2_i32 : i32
    %c8_i32_30 = arith.constant 8 : i32
    %81 = arith.muli %80, %c8_i32_30 : i32
    %82 = tpu.assume_multiple %81, 8 : i32
    %83 = arith.index_cast %79 : i32 to index
    %c0_31 = arith.constant 0 : index
    %84 = vector.load %arg7[%83, %c0_31] : memref<64x256xf32, #tpu.memory_space<vmem>>, vector<8x256xf32>
    %cst_32 = arith.constant dense<0.000000e+00> : vector<8x256xf32>
    %85 = tpu.matmul %71, %7, %cst_32 {dimension_numbers = #tpu.dot_dimension_numbers<[1], [0], [0], [1], [0, 0, 1, 1], [], []>} : vector<8x64xbf16>, vector<64x256xbf16>, vector<8x256xf32> -> vector<8x256xf32>
    %86 = arith.addf %84, %85 : vector<8x256xf32>
    %87 = arith.negf %86 : vector<8x256xf32>
    %88 = math.exp %87 : vector<8x256xf32>
    %cst_33 = arith.constant 1.000000e+00 : f32
    %89 = vector.broadcast %cst_33 : f32 to vector<8x256xf32>
    %90 = arith.addf %89, %88 : vector<8x256xf32>
    %91 = arith.divf %89, %90 : vector<8x256xf32>
    %92 = vector.extract_strided_slice %91 {offsets = [0, 0], sizes = [8, 64], strides = [1, 1]} : vector<8x256xf32> to vector<8x64xf32>
    %93 = vector.extract_strided_slice %91 {offsets = [0, 64], sizes = [8, 64], strides = [1, 1]} : vector<8x256xf32> to vector<8x64xf32>
    %94 = vector.extract_strided_slice %91 {offsets = [0, 128], sizes = [8, 64], strides = [1, 1]} : vector<8x256xf32> to vector<8x64xf32>
    %cst_34 = arith.constant 2.000000e+00 : f32
    %95 = vector.broadcast %cst_34 : f32 to vector<8x64xf32>
    %96 = arith.mulf %95, %94 : vector<8x64xf32>
    %cst_35 = arith.constant 1.000000e+00 : f32
    %97 = vector.broadcast %cst_35 : f32 to vector<8x64xf32>
    %98 = arith.subf %96, %97 : vector<8x64xf32>
    %99 = vector.extract_strided_slice %91 {offsets = [0, 192], sizes = [8, 64], strides = [1, 1]} : vector<8x256xf32> to vector<8x64xf32>
    %100 = arith.mulf %93, %68 : vector<8x64xf32>
    %101 = arith.mulf %92, %98 : vector<8x64xf32>
    %102 = arith.addf %100, %101 : vector<8x64xf32>
    %103 = math.tanh %102 : vector<8x64xf32>
    %104 = arith.mulf %99, %103 : vector<8x64xf32>
    %105 = arith.truncf %104 : vector<8x64xf32> to vector<8x64xbf16>
    %106 = vector.extract_strided_slice %105 {offsets = [0, 0], sizes = [8, 32], strides = [1, 1]} : vector<8x64xbf16> to vector<8x32xbf16>
    %107 = arith.index_cast %79 : i32 to index
    %c0_36 = arith.constant 0 : index
    %108 = vector.load %arg8[%107, %c0_36] : memref<64x64xbf16, #tpu.memory_space<vmem>>, vector<8x32xbf16>
    tpu.vector_store %arg8[%107, %c0_36], %106 {strides = array<i32>} : memref<64x64xbf16, #tpu.memory_space<vmem>>, vector<8x32xbf16>,
    %109 = vector.extract_strided_slice %105 {offsets = [0, 32], sizes = [8, 32], strides = [1, 1]} : vector<8x64xbf16> to vector<8x32xbf16>
    %110 = arith.index_cast %82 : i32 to index
    %c32_37 = arith.constant 32 : index
    %111 = vector.load %arg8[%110, %c32_37] : memref<64x64xbf16, #tpu.memory_space<vmem>>, vector<8x32xbf16>
    tpu.vector_store %arg8[%110, %c32_37], %109 {strides = array<i32>} : memref<64x64xbf16, #tpu.memory_space<vmem>>, vector<8x32xbf16>,
    %c3_i32 = arith.constant 3 : i32
    %c8_i32_38 = arith.constant 8 : i32
    %112 = arith.muli %c3_i32, %c8_i32_38 : i32
    %113 = tpu.assume_multiple %112, 8 : i32
    %c7_i32_39 = arith.constant 7 : i32
    %114 = arith.subi %c7_i32_39, %c3_i32 : i32
    %c8_i32_40 = arith.constant 8 : i32
    %115 = arith.muli %114, %c8_i32_40 : i32
    %116 = tpu.assume_multiple %115, 8 : i32
    %117 = arith.index_cast %113 : i32 to index
    %c0_41 = arith.constant 0 : index
    %118 = vector.load %arg7[%117, %c0_41] : memref<64x256xf32, #tpu.memory_space<vmem>>, vector<8x256xf32>
    %cst_42 = arith.constant dense<0.000000e+00> : vector<8x256xf32>
    %119 = tpu.matmul %105, %7, %cst_42 {dimension_numbers = #tpu.dot_dimension_numbers<[1], [0], [0], [1], [0, 0, 1, 1], [], []>} : vector<8x64xbf16>, vector<64x256xbf16>, vector<8x256xf32> -> vector<8x256xf32>
    %120 = arith.addf %118, %119 : vector<8x256xf32>
    %121 = arith.negf %120 : vector<8x256xf32>
    %122 = math.exp %121 : vector<8x256xf32>
    %cst_43 = arith.constant 1.000000e+00 : f32
    %123 = vector.broadcast %cst_43 : f32 to vector<8x256xf32>
    %124 = arith.addf %123, %122 : vector<8x256xf32>
    %125 = arith.divf %123, %124 : vector<8x256xf32>
    %126 = vector.extract_strided_slice %125 {offsets = [0, 0], sizes = [8, 64], strides = [1, 1]} : vector<8x256xf32> to vector<8x64xf32>
    %127 = vector.extract_strided_slice %125 {offsets = [0, 64], sizes = [8, 64], strides = [1, 1]} : vector<8x256xf32> to vector<8x64xf32>
    %128 = vector.extract_strided_slice %125 {offsets = [0, 128], sizes = [8, 64], strides = [1, 1]} : vector<8x256xf32> to vector<8x64xf32>
    %cst_44 = arith.constant 2.000000e+00 : f32
    %129 = vector.broadcast %cst_44 : f32 to vector<8x64xf32>
    %130 = arith.mulf %129, %128 : vector<8x64xf32>
    %cst_45 = arith.constant 1.000000e+00 : f32
    %131 = vector.broadcast %cst_45 : f32 to vector<8x64xf32>
    %132 = arith.subf %130, %131 : vector<8x64xf32>
    %133 = vector.extract_strided_slice %125 {offsets = [0, 192], sizes = [8, 64], strides = [1, 1]} : vector<8x256xf32> to vector<8x64xf32>
    %134 = arith.mulf %127, %102 : vector<8x64xf32>
    %135 = arith.mulf %126, %132 : vector<8x64xf32>
    %136 = arith.addf %134, %135 : vector<8x64xf32>
    %137 = math.tanh %136 : vector<8x64xf32>
    %138 = arith.mulf %133, %137 : vector<8x64xf32>
    %139 = arith.truncf %138 : vector<8x64xf32> to vector<8x64xbf16>
    %140 = vector.extract_strided_slice %139 {offsets = [0, 0], sizes = [8, 32], strides = [1, 1]} : vector<8x64xbf16> to vector<8x32xbf16>
    %141 = arith.index_cast %113 : i32 to index
    %c0_46 = arith.constant 0 : index
    %142 = vector.load %arg8[%141, %c0_46] : memref<64x64xbf16, #tpu.memory_space<vmem>>, vector<8x32xbf16>
    tpu.vector_store %arg8[%141, %c0_46], %140 {strides = array<i32>} : memref<64x64xbf16, #tpu.memory_space<vmem>>, vector<8x32xbf16>,
    %143 = vector.extract_strided_slice %139 {offsets = [0, 32], sizes = [8, 32], strides = [1, 1]} : vector<8x64xbf16> to vector<8x32xbf16>
    %144 = arith.index_cast %116 : i32 to index
    %c32_47 = arith.constant 32 : index
    %145 = vector.load %arg8[%144, %c32_47] : memref<64x64xbf16, #tpu.memory_space<vmem>>, vector<8x32xbf16>
    tpu.vector_store %arg8[%144, %c32_47], %143 {strides = array<i32>} : memref<64x64xbf16, #tpu.memory_space<vmem>>, vector<8x32xbf16>,
    %c4_i32 = arith.constant 4 : i32
    %c8_i32_48 = arith.constant 8 : i32
    %146 = arith.muli %c4_i32, %c8_i32_48 : i32
    %147 = tpu.assume_multiple %146, 8 : i32
    %c7_i32_49 = arith.constant 7 : i32
    %148 = arith.subi %c7_i32_49, %c4_i32 : i32
    %c8_i32_50 = arith.constant 8 : i32
    %149 = arith.muli %148, %c8_i32_50 : i32
    %150 = tpu.assume_multiple %149, 8 : i32
    %151 = arith.index_cast %147 : i32 to index
    %c0_51 = arith.constant 0 : index
    %152 = vector.load %arg7[%151, %c0_51] : memref<64x256xf32, #tpu.memory_space<vmem>>, vector<8x256xf32>
    %cst_52 = arith.constant dense<0.000000e+00> : vector<8x256xf32>
    %153 = tpu.matmul %139, %7, %cst_52 {dimension_numbers = #tpu.dot_dimension_numbers<[1], [0], [0], [1], [0, 0, 1, 1], [], []>} : vector<8x64xbf16>, vector<64x256xbf16>, vector<8x256xf32> -> vector<8x256xf32>
    %154 = arith.addf %152, %153 : vector<8x256xf32>
    %155 = arith.negf %154 : vector<8x256xf32>
    %156 = math.exp %155 : vector<8x256xf32>
    %cst_53 = arith.constant 1.000000e+00 : f32
    %157 = vector.broadcast %cst_53 : f32 to vector<8x256xf32>
    %158 = arith.addf %157, %156 : vector<8x256xf32>
    %159 = arith.divf %157, %158 : vector<8x256xf32>
    %160 = vector.extract_strided_slice %159 {offsets = [0, 0], sizes = [8, 64], strides = [1, 1]} : vector<8x256xf32> to vector<8x64xf32>
    %161 = vector.extract_strided_slice %159 {offsets = [0, 64], sizes = [8, 64], strides = [1, 1]} : vector<8x256xf32> to vector<8x64xf32>
    %162 = vector.extract_strided_slice %159 {offsets = [0, 128], sizes = [8, 64], strides = [1, 1]} : vector<8x256xf32> to vector<8x64xf32>
    %cst_54 = arith.constant 2.000000e+00 : f32
    %163 = vector.broadcast %cst_54 : f32 to vector<8x64xf32>
    %164 = arith.mulf %163, %162 : vector<8x64xf32>
    %cst_55 = arith.constant 1.000000e+00 : f32
    %165 = vector.broadcast %cst_55 : f32 to vector<8x64xf32>
    %166 = arith.subf %164, %165 : vector<8x64xf32>
    %167 = vector.extract_strided_slice %159 {offsets = [0, 192], sizes = [8, 64], strides = [1, 1]} : vector<8x256xf32> to vector<8x64xf32>
    %168 = arith.mulf %161, %136 : vector<8x64xf32>
    %169 = arith.mulf %160, %166 : vector<8x64xf32>
    %170 = arith.addf %168, %169 : vector<8x64xf32>
    %171 = math.tanh %170 : vector<8x64xf32>
    %172 = arith.mulf %167, %171 : vector<8x64xf32>
    %173 = arith.truncf %172 : vector<8x64xf32> to vector<8x64xbf16>
    %174 = vector.extract_strided_slice %173 {offsets = [0, 0], sizes = [8, 32], strides = [1, 1]} : vector<8x64xbf16> to vector<8x32xbf16>
    %175 = arith.index_cast %147 : i32 to index
    %c0_56 = arith.constant 0 : index
    %176 = vector.load %arg8[%175, %c0_56] : memref<64x64xbf16, #tpu.memory_space<vmem>>, vector<8x32xbf16>
    tpu.vector_store %arg8[%175, %c0_56], %174 {strides = array<i32>} : memref<64x64xbf16, #tpu.memory_space<vmem>>, vector<8x32xbf16>,
    %177 = vector.extract_strided_slice %173 {offsets = [0, 32], sizes = [8, 32], strides = [1, 1]} : vector<8x64xbf16> to vector<8x32xbf16>
    %178 = arith.index_cast %150 : i32 to index
    %c32_57 = arith.constant 32 : index
    %179 = vector.load %arg8[%178, %c32_57] : memref<64x64xbf16, #tpu.memory_space<vmem>>, vector<8x32xbf16>
    tpu.vector_store %arg8[%178, %c32_57], %177 {strides = array<i32>} : memref<64x64xbf16, #tpu.memory_space<vmem>>, vector<8x32xbf16>,
    %c5_i32 = arith.constant 5 : i32
    %c8_i32_58 = arith.constant 8 : i32
    %180 = arith.muli %c5_i32, %c8_i32_58 : i32
    %181 = tpu.assume_multiple %180, 8 : i32
    %c7_i32_59 = arith.constant 7 : i32
    %182 = arith.subi %c7_i32_59, %c5_i32 : i32
    %c8_i32_60 = arith.constant 8 : i32
    %183 = arith.muli %182, %c8_i32_60 : i32
    %184 = tpu.assume_multiple %183, 8 : i32
    %185 = arith.index_cast %181 : i32 to index
    %c0_61 = arith.constant 0 : index
    %186 = vector.load %arg7[%185, %c0_61] : memref<64x256xf32, #tpu.memory_space<vmem>>, vector<8x256xf32>
    %cst_62 = arith.constant dense<0.000000e+00> : vector<8x256xf32>
    %187 = tpu.matmul %173, %7, %cst_62 {dimension_numbers = #tpu.dot_dimension_numbers<[1], [0], [0], [1], [0, 0, 1, 1], [], []>} : vector<8x64xbf16>, vector<64x256xbf16>, vector<8x256xf32> -> vector<8x256xf32>
    %188 = arith.addf %186, %187 : vector<8x256xf32>
    %189 = arith.negf %188 : vector<8x256xf32>
    %190 = math.exp %189 : vector<8x256xf32>
    %cst_63 = arith.constant 1.000000e+00 : f32
    %191 = vector.broadcast %cst_63 : f32 to vector<8x256xf32>
    %192 = arith.addf %191, %190 : vector<8x256xf32>
    %193 = arith.divf %191, %192 : vector<8x256xf32>
    %194 = vector.extract_strided_slice %193 {offsets = [0, 0], sizes = [8, 64], strides = [1, 1]} : vector<8x256xf32> to vector<8x64xf32>
    %195 = vector.extract_strided_slice %193 {offsets = [0, 64], sizes = [8, 64], strides = [1, 1]} : vector<8x256xf32> to vector<8x64xf32>
    %196 = vector.extract_strided_slice %193 {offsets = [0, 128], sizes = [8, 64], strides = [1, 1]} : vector<8x256xf32> to vector<8x64xf32>
    %cst_64 = arith.constant 2.000000e+00 : f32
    %197 = vector.broadcast %cst_64 : f32 to vector<8x64xf32>
    %198 = arith.mulf %197, %196 : vector<8x64xf32>
    %cst_65 = arith.constant 1.000000e+00 : f32
    %199 = vector.broadcast %cst_65 : f32 to vector<8x64xf32>
    %200 = arith.subf %198, %199 : vector<8x64xf32>
    %201 = vector.extract_strided_slice %193 {offsets = [0, 192], sizes = [8, 64], strides = [1, 1]} : vector<8x256xf32> to vector<8x64xf32>
    %202 = arith.mulf %195, %170 : vector<8x64xf32>
    %203 = arith.mulf %194, %200 : vector<8x64xf32>
    %204 = arith.addf %202, %203 : vector<8x64xf32>
    %205 = math.tanh %204 : vector<8x64xf32>
    %206 = arith.mulf %201, %205 : vector<8x64xf32>
    %207 = arith.truncf %206 : vector<8x64xf32> to vector<8x64xbf16>
    %208 = vector.extract_strided_slice %207 {offsets = [0, 0], sizes = [8, 32], strides = [1, 1]} : vector<8x64xbf16> to vector<8x32xbf16>
    %209 = arith.index_cast %181 : i32 to index
    %c0_66 = arith.constant 0 : index
    %210 = vector.load %arg8[%209, %c0_66] : memref<64x64xbf16, #tpu.memory_space<vmem>>, vector<8x32xbf16>
    tpu.vector_store %arg8[%209, %c0_66], %208 {strides = array<i32>} : memref<64x64xbf16, #tpu.memory_space<vmem>>, vector<8x32xbf16>,
    %211 = vector.extract_strided_slice %207 {offsets = [0, 32], sizes = [8, 32], strides = [1, 1]} : vector<8x64xbf16> to vector<8x32xbf16>
    %212 = arith.index_cast %184 : i32 to index
    %c32_67 = arith.constant 32 : index
    %213 = vector.load %arg8[%212, %c32_67] : memref<64x64xbf16, #tpu.memory_space<vmem>>, vector<8x32xbf16>
    tpu.vector_store %arg8[%212, %c32_67], %211 {strides = array<i32>} : memref<64x64xbf16, #tpu.memory_space<vmem>>, vector<8x32xbf16>,
    %c6_i32 = arith.constant 6 : i32
    %c8_i32_68 = arith.constant 8 : i32
    %214 = arith.muli %c6_i32, %c8_i32_68 : i32
    %215 = tpu.assume_multiple %214, 8 : i32
    %c7_i32_69 = arith.constant 7 : i32
    %216 = arith.subi %c7_i32_69, %c6_i32 : i32
    %c8_i32_70 = arith.constant 8 : i32
    %217 = arith.muli %216, %c8_i32_70 : i32
    %218 = tpu.assume_multiple %217, 8 : i32
    %219 = arith.index_cast %215 : i32 to index
    %c0_71 = arith.constant 0 : index
    %220 = vector.load %arg7[%219, %c0_71] : memref<64x256xf32, #tpu.memory_space<vmem>>, vector<8x256xf32>
    %cst_72 = arith.constant dense<0.000000e+00> : vector<8x256xf32>
    %221 = tpu.matmul %207, %7, %cst_72 {dimension_numbers = #tpu.dot_dimension_numbers<[1], [0], [0], [1], [0, 0, 1, 1], [], []>} : vector<8x64xbf16>, vector<64x256xbf16>, vector<8x256xf32> -> vector<8x256xf32>
    %222 = arith.addf %220, %221 : vector<8x256xf32>
    %223 = arith.negf %222 : vector<8x256xf32>
    %224 = math.exp %223 : vector<8x256xf32>
    %cst_73 = arith.constant 1.000000e+00 : f32
    %225 = vector.broadcast %cst_73 : f32 to vector<8x256xf32>
    %226 = arith.addf %225, %224 : vector<8x256xf32>
    %227 = arith.divf %225, %226 : vector<8x256xf32>
    %228 = vector.extract_strided_slice %227 {offsets = [0, 0], sizes = [8, 64], strides = [1, 1]} : vector<8x256xf32> to vector<8x64xf32>
    %229 = vector.extract_strided_slice %227 {offsets = [0, 64], sizes = [8, 64], strides = [1, 1]} : vector<8x256xf32> to vector<8x64xf32>
    %230 = vector.extract_strided_slice %227 {offsets = [0, 128], sizes = [8, 64], strides = [1, 1]} : vector<8x256xf32> to vector<8x64xf32>
    %cst_74 = arith.constant 2.000000e+00 : f32
    %231 = vector.broadcast %cst_74 : f32 to vector<8x64xf32>
    %232 = arith.mulf %231, %230 : vector<8x64xf32>
    %cst_75 = arith.constant 1.000000e+00 : f32
    %233 = vector.broadcast %cst_75 : f32 to vector<8x64xf32>
    %234 = arith.subf %232, %233 : vector<8x64xf32>
    %235 = vector.extract_strided_slice %227 {offsets = [0, 192], sizes = [8, 64], strides = [1, 1]} : vector<8x256xf32> to vector<8x64xf32>
    %236 = arith.mulf %229, %204 : vector<8x64xf32>
    %237 = arith.mulf %228, %234 : vector<8x64xf32>
    %238 = arith.addf %236, %237 : vector<8x64xf32>
    %239 = math.tanh %238 : vector<8x64xf32>
    %240 = arith.mulf %235, %239 : vector<8x64xf32>
    %241 = arith.truncf %240 : vector<8x64xf32> to vector<8x64xbf16>
    %242 = vector.extract_strided_slice %241 {offsets = [0, 0], sizes = [8, 32], strides = [1, 1]} : vector<8x64xbf16> to vector<8x32xbf16>
    %243 = arith.index_cast %215 : i32 to index
    %c0_76 = arith.constant 0 : index
    %244 = vector.load %arg8[%243, %c0_76] : memref<64x64xbf16, #tpu.memory_space<vmem>>, vector<8x32xbf16>
    tpu.vector_store %arg8[%243, %c0_76], %242 {strides = array<i32>} : memref<64x64xbf16, #tpu.memory_space<vmem>>, vector<8x32xbf16>,
    %245 = vector.extract_strided_slice %241 {offsets = [0, 32], sizes = [8, 32], strides = [1, 1]} : vector<8x64xbf16> to vector<8x32xbf16>
    %246 = arith.index_cast %218 : i32 to index
    %c32_77 = arith.constant 32 : index
    %247 = vector.load %arg8[%246, %c32_77] : memref<64x64xbf16, #tpu.memory_space<vmem>>, vector<8x32xbf16>
    tpu.vector_store %arg8[%246, %c32_77], %245 {strides = array<i32>} : memref<64x64xbf16, #tpu.memory_space<vmem>>, vector<8x32xbf16>,
    %c7_i32_78 = arith.constant 7 : i32
    %c8_i32_79 = arith.constant 8 : i32
    %248 = arith.muli %c7_i32_78, %c8_i32_79 : i32
    %249 = tpu.assume_multiple %248, 8 : i32
    %c7_i32_80 = arith.constant 7 : i32
    %250 = arith.subi %c7_i32_80, %c7_i32_78 : i32
    %c8_i32_81 = arith.constant 8 : i32
    %251 = arith.muli %250, %c8_i32_81 : i32
    %252 = tpu.assume_multiple %251, 8 : i32
    %253 = arith.index_cast %249 : i32 to index
    %c0_82 = arith.constant 0 : index
    %254 = vector.load %arg7[%253, %c0_82] : memref<64x256xf32, #tpu.memory_space<vmem>>, vector<8x256xf32>
    %cst_83 = arith.constant dense<0.000000e+00> : vector<8x256xf32>
    %255 = tpu.matmul %241, %7, %cst_83 {dimension_numbers = #tpu.dot_dimension_numbers<[1], [0], [0], [1], [0, 0, 1, 1], [], []>} : vector<8x64xbf16>, vector<64x256xbf16>, vector<8x256xf32> -> vector<8x256xf32>
    %256 = arith.addf %254, %255 : vector<8x256xf32>
    %257 = arith.negf %256 : vector<8x256xf32>
    %258 = math.exp %257 : vector<8x256xf32>
    %cst_84 = arith.constant 1.000000e+00 : f32
    %259 = vector.broadcast %cst_84 : f32 to vector<8x256xf32>
    %260 = arith.addf %259, %258 : vector<8x256xf32>
    %261 = arith.divf %259, %260 : vector<8x256xf32>
    %262 = vector.extract_strided_slice %261 {offsets = [0, 0], sizes = [8, 64], strides = [1, 1]} : vector<8x256xf32> to vector<8x64xf32>
    %263 = vector.extract_strided_slice %261 {offsets = [0, 64], sizes = [8, 64], strides = [1, 1]} : vector<8x256xf32> to vector<8x64xf32>
    %264 = vector.extract_strided_slice %261 {offsets = [0, 128], sizes = [8, 64], strides = [1, 1]} : vector<8x256xf32> to vector<8x64xf32>
    %cst_85 = arith.constant 2.000000e+00 : f32
    %265 = vector.broadcast %cst_85 : f32 to vector<8x64xf32>
    %266 = arith.mulf %265, %264 : vector<8x64xf32>
    %cst_86 = arith.constant 1.000000e+00 : f32
    %267 = vector.broadcast %cst_86 : f32 to vector<8x64xf32>
    %268 = arith.subf %266, %267 : vector<8x64xf32>
    %269 = vector.extract_strided_slice %261 {offsets = [0, 192], sizes = [8, 64], strides = [1, 1]} : vector<8x256xf32> to vector<8x64xf32>
    %270 = arith.mulf %263, %238 : vector<8x64xf32>
    %271 = arith.mulf %262, %268 : vector<8x64xf32>
    %272 = arith.addf %270, %271 : vector<8x64xf32>
    %273 = math.tanh %272 : vector<8x64xf32>
    %274 = arith.mulf %269, %273 : vector<8x64xf32>
    %275 = arith.truncf %274 : vector<8x64xf32> to vector<8x64xbf16>
    %276 = vector.extract_strided_slice %275 {offsets = [0, 0], sizes = [8, 32], strides = [1, 1]} : vector<8x64xbf16> to vector<8x32xbf16>
    %277 = arith.index_cast %249 : i32 to index
    %c0_87 = arith.constant 0 : index
    %278 = vector.load %arg8[%277, %c0_87] : memref<64x64xbf16, #tpu.memory_space<vmem>>, vector<8x32xbf16>
    tpu.vector_store %arg8[%277, %c0_87], %276 {strides = array<i32>} : memref<64x64xbf16, #tpu.memory_space<vmem>>, vector<8x32xbf16>,
    %279 = vector.extract_strided_slice %275 {offsets = [0, 32], sizes = [8, 32], strides = [1, 1]} : vector<8x64xbf16> to vector<8x32xbf16>
    %280 = arith.index_cast %252 : i32 to index
    %c32_88 = arith.constant 32 : index
    %281 = vector.load %arg8[%280, %c32_88] : memref<64x64xbf16, #tpu.memory_space<vmem>>, vector<8x32xbf16>
    tpu.vector_store %arg8[%280, %c32_88], %279 {strides = array<i32>} : memref<64x64xbf16, #tpu.memory_space<vmem>>, vector<8x32xbf16>,
    %c8_i32_89 = arith.constant 8 : i32
    %c0_90 = arith.constant 0 : index
    %c0_91 = arith.constant 0 : index
    %282 = vector.load %arg8[%c0_90, %c0_91] : memref<64x64xbf16, #tpu.memory_space<vmem>>, vector<64x64xbf16>
    %c0_92 = arith.constant 0 : index
    %c0_93 = arith.constant 0 : index
    %283 = vector.load %arg4[%c0_92, %c0_93] : memref<64x128xbf16, #tpu.memory_space<vmem>>, vector<64x128xbf16>
    %cst_94 = arith.constant dense<0.000000e+00> : vector<64x128xf32>
    %284 = tpu.matmul %282, %283, %cst_94 {dimension_numbers = #tpu.dot_dimension_numbers<[1], [0], [0], [1], [0, 0, 1, 1], [], []>} : vector<64x64xbf16>, vector<64x128xbf16>, vector<64x128xf32> -> vector<64x128xf32>
    %c0_95 = arith.constant 0 : index
    %c0_96 = arith.constant 0 : index
    %285 = vector.load %arg5[%c0_95, %c0_96] : memref<1x128xf32, #tpu.memory_space<vmem>>, vector<1x128xf32>
    %286 = vector.broadcast %285 : vector<1x128xf32> to vector<64x128xf32>
    %287 = arith.addf %284, %286 : vector<64x128xf32>
    %c0_97 = arith.constant 0 : index
    %c0_98 = arith.constant 0 : index
    %288 = vector.load %arg6[%c0_97, %c0_98] : memref<64x128xf32, #tpu.memory_space<vmem>>, vector<64x128xf32>
    tpu.vector_store %arg6[%c0_97, %c0_98], %287 {strides = array<i32>} : memref<64x128xf32, #tpu.memory_space<vmem>>, vector<64x128xf32>,
    return
  }
}

</mosaic_0001>

<llo_original>
// kernel: tpu_custom_call.1
$region0: #{tpu_custom_call.1}
  #allocation0 [shape = 'u32[]', space=smem, size = 0x4, offset = 0x4, fixed_abs, tag = 'smem constant byte address 0x4 - core index']
  #allocation1 [shape = 'u32[144,128]{1,0:T(1,128)}', space=vmem, size = 0x12000, scoped, tag = 'internal scratch']
  #allocation2 [shape = 'f32[64,256]{1,0:T(8,128)}', space=vmem, size = 0x10000, scoped, tag = 'scratch operand']
  #allocation3 [shape = 'bf16[64,64]{1,0:T(8,128)(2,1)}', space=vmem, size = 0x4000, scoped, tag = 'scratch operand']
  %s0 = inlined_call_operand.vmem [shape: bf16[64,32], index: 0, kind: input, shape index: {}]
  %s1 = inlined_call_operand.vmem [shape: bf16[32,256], index: 1, kind: input, shape index: {}]
  %s2 = inlined_call_operand.vmem [shape: f32[1,256], index: 2, kind: input, shape index: {}]
  %s3 = inlined_call_operand.hbm [shape: bf16[64,256], index: 3, kind: input, shape index: {}]
  %s4 = inlined_call_operand.hbm [shape: bf16[64,128], index: 4, kind: input, shape index: {}]
  %s5 = inlined_call_operand.vmem [shape: f32[1,128], index: 5, kind: input, shape index: {}]
  %s6 = inlined_call_operand.hbm [shape: f32[64,128], index: 6, kind: output, shape index: {}]
  %s7 = sld [smem:[#allocation0]]
  $region42: #{tpu_custom_call.1} parent=0
    _
  %s9 = ssub.s32 1, %s7
  %s10 = scalar_select 0, %s9, %s7
  $region1: #{tpu_custom_call.1} parent=0
    #allocation4 [shape = 'u8[32768]{0}', space=vmem, size = 0x8000, scoped, tag = 'input window, operand 3, single buffered']
    #allocation5 [shape = 's32[1]{0}', space=sflag, size = 0x4, scoped, tag = 'scoped memory for tpu_custom_call.1']
    #allocation6 [shape = 's32[1]{0}', space=sflag, size = 0x4, scoped, tag = 'scoped memory for tpu_custom_call.1']
    #allocation7 [shape = 'u8[16384]{0}', space=vmem, size = 0x4000, scoped, tag = 'input window, operand 4, single buffered']
    #allocation8 [shape = 's32[1]{0}', space=sflag, size = 0x4, scoped, tag = 'scoped memory for tpu_custom_call.1']
    #allocation9 [shape = 'u8[32768]{0}', space=vmem, size = 0x8000, scoped, tag = 'output window, operand 0, single buffered']
    %11 = vsyncpa [#allocation5], 0
    %12 = vsyncpa [#allocation8], 0
    %13 = vsyncpa [#allocation6], 0
    // Predicated region
    $region2: #{tpu_custom_call.1} parent=1 // pred_check
      _
    $region3: #{tpu_custom_call.1} parent=1 // pred_check_branch
      %15 = sbr.rel (0) target = $region5
    $region4: #{tpu_custom_call.1} parent=1 // pred_region
      _
    $region5: #{tpu_custom_call.1} parent=1 // pred_fallthru
      _
    // Predicated region
    $region6: #{tpu_custom_call.1} parent=1 // pred_check
      _
    $region7: #{tpu_custom_call.1} parent=1 // pred_check_branch
      %17 = sbr.rel (0) target = $region9
    $region8: #{tpu_custom_call.1} parent=1 // pred_region
      _
    $region9: #{tpu_custom_call.1} parent=1 // pred_fallthru
      _
    // Predicated region
    $region10: #{tpu_custom_call.1} parent=1 // pred_check
      _
    $region11: #{tpu_custom_call.1} parent=1 // pred_check_branch
      %19 = sbr.rel (0) target = $region13
    $region12: #{tpu_custom_call.1} parent=1 // pred_region
      _
    $region13: #{tpu_custom_call.1} parent=1 // pred_fallthru
      _
    // Predicated region
    $region14: #{tpu_custom_call.1} parent=1 // pred_check
      _
    $region15: #{tpu_custom_call.1} parent=1 // pred_check_branch
      %21 = sbr.rel (0) target = $region17
    $region16: #{tpu_custom_call.1} parent=1 // pred_region
      %s23 = ssub.s32 1024, 1024
      %24 = vsyncadd [#allocation5], %s23
      %s25 = sshll.u32 [#allocation4], 4
      %s26 = int_to_ptr.vmem [resolvable:$true] %s25
      %31 = dma.hbm_to_vmem [thread:$0]  %s3, 1024, %s26, [#allocation5], 128, 128, 8
    $region17: #{tpu_custom_call.1} parent=1 // pred_fallthru
      _
    // Predicated region
    $region18: #{tpu_custom_call.1} parent=1 // pred_check
      _
    $region19: #{tpu_custom_call.1} parent=1 // pred_check_branch
      %33 = sbr.rel (0) target = $region21
    $region20: #{tpu_custom_call.1} parent=1 // pred_region
      %s35 = ssub.s32 512, 512
      %36 = vsyncadd [#allocation8], %s35
      %s37 = sshll.u32 [#allocation7], 4
      %s38 = int_to_ptr.vmem [resolvable:$true] %s37
      %43 = dma.hbm_to_vmem [thread:$0]  %s4, 512, %s38, [#allocation8], 64, 64, 4
    $region21: #{tpu_custom_call.1} parent=1 // pred_fallthru
      _
    // Predicated region
    $region22: #{tpu_custom_call.1} parent=1 // pred_check
      _
    $region23: #{tpu_custom_call.1} parent=1 // pred_check_branch
      %45 = sbr.rel (0) target = $region25
    $region24: #{tpu_custom_call.1} parent=1 // pred_region
      _
    $region25: #{tpu_custom_call.1} parent=1 // pred_fallthru
      _
    // Predicated region
    $region26: #{tpu_custom_call.1} parent=1 // pred_check
      _
    $region27: #{tpu_custom_call.1} parent=1 // pred_check_branch
      %47 = sbr.rel (0) target = $region29
    $region28: #{tpu_custom_call.1} parent=1 // pred_region
      %48 = dma.done [#allocation5], 1024
    $region29: #{tpu_custom_call.1} parent=1 // pred_fallthru
      _
    // Predicated region
    $region30: #{tpu_custom_call.1} parent=1 // pred_check
      _
    $region31: #{tpu_custom_call.1} parent=1 // pred_check_branch
      %50 = sbr.rel (0) target = $region33
    $region32: #{tpu_custom_call.1} parent=1 // pred_region
      %51 = dma.done [#allocation8], 512
    $region33: #{tpu_custom_call.1} parent=1 // pred_fallthru
      _
    %v53 = vld [vmem:[%s0] sm:$0xf]
    %v54 = vld [vmem:[%s0 + $0x4] sm:$0xf]
    %v55 = vld [vmem:[%s0 + $0x8] sm:$0xf]
    %v56 = vld [vmem:[%s0 + $0xc] sm:$0xf]
    %v57 = vld [vmem:[%s0 + $0x10] sm:$0xf]
    %v58 = vld [vmem:[%s0 + $0x14] sm:$0xf]
    %v59 = vld [vmem:[%s0 + $0x18] sm:$0xf]
    %v60 = vld [vmem:[%s0 + $0x1c] sm:$0xf]
    %v61 = vld [vmem:[%s1] sm:$0xff]
    %v62 = vld [vmem:[%s1 + $0x8] sm:$0xff]
    %v63 = vld [vmem:[%s1 + $0x10] sm:$0xff]
    %v64 = vld [vmem:[%s1 + $0x18] sm:$0xff]
    %v65 = vld [vmem:[%s2] sm:$0x3]
    %v67 = vlaneseq
    %v68 = vshrl.u32 %v67, 7
    %v69 = vsub.s32 0, %v68
    %v70 = vrot.slane %v65, %v69
    %v71 = vlaneseq
    %v72 = vshrl.u32 %v71, 7
    %v73 = vsub.s32 1, %v72
    %v74 = vrot.slane %v65, %v73
    %v85 = vunpack.c.l.b16 %v53
    %v86 = vunpack.c.l.b16 %v54
    %v87 = vunpack.c.l.b16 %v55
    %v88 = vunpack.c.l.b16 %v56
    %v89 = vunpack.c.l.b16 %v57
    %v90 = vunpack.c.l.b16 %v58
    %v91 = vunpack.c.l.b16 %v59
    %v92 = vunpack.c.l.b16 %v60
    %v93 = vpack.c.b16 %v86, %v85
    %v94 = vpack.c.b16 %v88, %v87
    %v95 = vpack.c.b16 %v90, %v89
    %v96 = vpack.c.b16 %v92, %v91
    %v101 = vunpack.c.l.b16 %v61
    %v102 = vunpack.c.h.b16 %v61
    %v103 = vunpack.c.l.b16 %v62
    %v104 = vunpack.c.h.b16 %v62
    %v105 = vunpack.c.l.b16 %v63
    %v106 = vunpack.c.h.b16 %v63
    %v107 = vunpack.c.l.b16 %v64
    %v108 = vunpack.c.h.b16 %v64
    %v109 = vpack.c.b16 %v103, %v101
    %v110 = vpack.c.b16 %v104, %v102
    %v111 = vpack.c.b16 %v107, %v105
    %v112 = vpack.c.b16 %v108, %v106
    %vm117 = vcmask 261120
    %v119 = vsel %vm117, %v93, 0
    %v122 = vsel %vm117, %v94, 0
    %v125 = vsel %vm117, %v95, 0
    %v128 = vsel %vm117, %v96, 0
    %130 = vmatprep.subr.bf16.mxu0 0
    %131 = vmatpush1.bf16.msra.mxu0 0
    %132 = vmatprep.subr.bf16.mxu0 0
    %133 = vmatpush1.bf16.msra.mxu0 0
    %134 = vmatprep.subr.bf16.mxu0 0
    %135 = vmatpush1.bf16.msra.mxu0 0
    %136 = vmatprep.subr.bf16.mxu0 0
    %137 = vmatpush1.bf16.msra.mxu0 0
    %138 = vmatprep.subr.bf16.mxu0 0
    %139 = vmatpush1.bf16.msra.mxu0 0
    %140 = vmatprep.subr.bf16.mxu0 0
    %141 = vmatpush1.bf16.msra.mxu0 0
    %142 = vmatprep.subr.bf16.mxu0 %v112
    %143 = vmatpush1.bf16.msra.mxu0 %v111
    %144 = vmatprep.subr.bf16.mxu0 %v110
    %145 = vmatpush1.bf16.msra.mxu0 %v109
    %146 = vmatprep.subr.bf16.mxu0 0
    %147 = vmatpush2.bf16.msra.mxu0 0
    %148 = vmatprep.subr.bf16.mxu0 0
    %149 = vmatpush2.bf16.msra.mxu0 0
    %150 = vmatprep.subr.bf16.mxu0 0
    %151 = vmatpush2.bf16.msra.mxu0 0
    %152 = vmatprep.subr.bf16.mxu0 0
    %153 = vmatpush2.bf16.msra.mxu0 0
    %154 = vmatprep.subr.bf16.mxu0 0
    %155 = vmatpush2.bf16.msra.mxu0 0
    %156 = vmatprep.subr.bf16.mxu0 0
    %157 = vmatpush2.bf16.msra.mxu0 0
    %158 = vmatprep.subr.bf16.mxu0 0
    %159 = vmatpush2.bf16.msra.mxu0 0
    %160 = vmatprep.subr.bf16.mxu0 0
    %161 = vmatpush2.bf16.msra.mxu0 0
    %162 = vmatprep.mubr.bf16.mxu0 0
    %163 = vmatmul.mubr.bf16.gmra.mxu0 %v119
    %v164 = vpop.f32.mrf.mxu0
    %v165 = vadd.f32 %v70, %v164
    %v166 = vpop.f32.mrf.mxu0
    %v167 = vadd.f32 %v74, %v166
    %v168 = vpop.f32.mrf.mxu0
    %v169 = vadd.f32 %v70, %v168
    %v170 = vpop.f32.mrf.mxu0
    %v171 = vadd.f32 %v74, %v170
    %172 = vmatprep.mubr.bf16.mxu0 0
    %173 = vmatmul.mubr.bf16.gmra.mxu0 %v122
    %v174 = vpop.f32.mrf.mxu0
    %v175 = vadd.f32 %v70, %v174
    %v176 = vpop.f32.mrf.mxu0
    %v177 = vadd.f32 %v74, %v176
    %v178 = vpop.f32.mrf.mxu0
    %v179 = vadd.f32 %v70, %v178
    %v180 = vpop.f32.mrf.mxu0
    %v181 = vadd.f32 %v74, %v180
    %182 = vmatprep.mubr.bf16.mxu0 0
    %183 = vmatmul.mubr.bf16.gmra.mxu0 %v125
    %v184 = vpop.f32.mrf.mxu0
    %v185 = vadd.f32 %v70, %v184
    %v186 = vpop.f32.mrf.mxu0
    %v187 = vadd.f32 %v74, %v186
    %v188 = vpop.f32.mrf.mxu0
    %v189 = vadd.f32 %v70, %v188
    %v190 = vpop.f32.mrf.mxu0
    %v191 = vadd.f32 %v74, %v190
    %192 = vmatprep.mubr.bf16.mxu0 0
    %193 = vmatmul.mubr.bf16.gmra.mxu0 %v128
    %v194 = vpop.f32.mrf.mxu0
    %v195 = vadd.f32 %v70, %v194
    %v196 = vpop.f32.mrf.mxu0
    %v197 = vadd.f32 %v74, %v196
    %v198 = vpop.f32.mrf.mxu0
    %v199 = vadd.f32 %v70, %v198
    %v200 = vpop.f32.mrf.mxu0
    %v201 = vadd.f32 %v74, %v200
    %202 = vdwg.mxu0
    %203 = vst [vmem:[#allocation2] sm:$0xff] %v165
    %204 = vst [vmem:[#allocation2 + $0x8] sm:$0xff] %v167
    %205 = vst [vmem:[#allocation2 + $0x10] sm:$0xff] %v169
    %206 = vst [vmem:[#allocation2 + $0x18] sm:$0xff] %v171
    %207 = vst [vmem:[#allocation2 + $0x20] sm:$0xff] %v175
    %208 = vst [vmem:[#allocation2 + $0x28] sm:$0xff] %v177
    %209 = vst [vmem:[#allocation2 + $0x30] sm:$0xff] %v179
    %210 = vst [vmem:[#allocation2 + $0x38] sm:$0xff] %v181
    %211 = vst [vmem:[#allocation2 + $0x40] sm:$0xff] %v185
    %212 = vst [vmem:[#allocation2 + $0x48] sm:$0xff] %v187
    %213 = vst [vmem:[#allocation2 + $0x50] sm:$0xff] %v189
    %214 = vst [vmem:[#allocation2 + $0x58] sm:$0xff] %v191
    %215 = vst [vmem:[#allocation2 + $0x60] sm:$0xff] %v195
    %216 = vst [vmem:[#allocation2 + $0x68] sm:$0xff] %v197
    %217 = vst [vmem:[#allocation2 + $0x70] sm:$0xff] %v199
    %218 = vst [vmem:[#allocation2 + $0x78] sm:$0xff] %v201
    %v219 = vld [vmem:[#allocation4] sm:$0xff]
    %v220 = vld [vmem:[#allocation4 + $0x8] sm:$0xff]
    %v221 = vld [vmem:[#allocation4 + $0x10] sm:$0xff]
    %v222 = vld [vmem:[#allocation4 + $0x18] sm:$0xff]
    %v223 = vld [vmem:[#allocation4 + $0x20] sm:$0xff]
    %v224 = vld [vmem:[#allocation4 + $0x28] sm:$0xff]
    %v225 = vld [vmem:[#allocation4 + $0x30] sm:$0xff]
    %v226 = vld [vmem:[#allocation4 + $0x38] sm:$0xff]
    %s227 = smul.u32 0, 2
    %s228 = smul.addr %s227, 8
    %s229 = scalar_lea.vmem [#allocation2], %s228
    %v230 = vld [vmem:[%s229] sm:$0xff]
    %v231 = vld [vmem:[%s229 + $0x8] sm:$0xff]
    %v240 = vunpack.c.l.b16 %v219
    %v241 = vunpack.c.h.b16 %v219
    %v242 = vunpack.c.l.b16 %v220
    %v243 = vunpack.c.h.b16 %v220
    %v244 = vunpack.c.l.b16 %v221
    %v245 = vunpack.c.h.b16 %v221
    %v246 = vunpack.c.l.b16 %v222
    %v247 = vunpack.c.h.b16 %v222
    %v248 = vunpack.c.l.b16 %v223
    %v249 = vunpack.c.h.b16 %v223
    %v250 = vunpack.c.l.b16 %v224
    %v251 = vunpack.c.h.b16 %v224
    %v252 = vunpack.c.l.b16 %v225
    %v253 = vunpack.c.h.b16 %v225
    %v254 = vunpack.c.l.b16 %v226
    %v255 = vunpack.c.h.b16 %v226
    %v256 = vpack.c.b16 %v242, %v240
    %v257 = vpack.c.b16 %v243, %v241
    %v258 = vpack.c.b16 %v246, %v244
    %v259 = vpack.c.b16 %v247, %v245
    %v260 = vpack.c.b16 %v250, %v248
    %v261 = vpack.c.b16 %v251, %v249
    %v262 = vpack.c.b16 %v254, %v252
    %v263 = vpack.c.b16 %v255, %v253
    %vm272 = vcmask 523264
    %v274 = vsel %vm272, 0, 0
    %276 = vmatprep.subr.bf16.mxu0 0
    %277 = vmatpush1.bf16.msra.mxu0 0
    %278 = vmatprep.subr.bf16.mxu0 0
    %279 = vmatpush1.bf16.msra.mxu0 0
    %280 = vmatprep.subr.bf16.mxu0 0
    %281 = vmatpush1.bf16.msra.mxu0 0
    %282 = vmatprep.subr.bf16.mxu0 0
    %283 = vmatpush1.bf16.msra.mxu0 0
    %284 = vmatprep.subr.bf16.mxu0 %v263
    %285 = vmatpush1.bf16.msra.mxu0 %v262
    %286 = vmatprep.subr.bf16.mxu0 %v261
    %287 = vmatpush1.bf16.msra.mxu0 %v260
    %288 = vmatprep.subr.bf16.mxu0 %v259
    %289 = vmatpush1.bf16.msra.mxu0 %v258
    %290 = vmatprep.subr.bf16.mxu0 %v257
    %291 = vmatpush1.bf16.msra.mxu0 %v256
    %292 = vmatprep.subr.bf16.mxu0 0
    %293 = vmatpush2.bf16.msra.mxu0 0
    %294 = vmatprep.subr.bf16.mxu0 0
    %295 = vmatpush2.bf16.msra.mxu0 0
    %296 = vmatprep.subr.bf16.mxu0 0
    %297 = vmatpush2.bf16.msra.mxu0 0
    %298 = vmatprep.subr.bf16.mxu0 0
    %299 = vmatpush2.bf16.msra.mxu0 0
    %300 = vmatprep.subr.bf16.mxu0 0
    %301 = vmatpush2.bf16.msra.mxu0 0
    %302 = vmatprep.subr.bf16.mxu0 0
    %303 = vmatpush2.bf16.msra.mxu0 0
    %304 = vmatprep.subr.bf16.mxu0 0
    %305 = vmatpush2.bf16.msra.mxu0 0
    %306 = vmatprep.subr.bf16.mxu0 0
    %307 = vmatpush2.bf16.msra.mxu0 0
    %308 = vmatprep.mubr.bf16.mxu0 0
    %309 = vmatmul.mubr.bf16.gmra.mxu0 %v274
    %v310 = vpop.f32.mrf.mxu0
    %v311 = vadd.f32 0.0, %v310
    %v312 = vpop.f32.mrf.mxu0
    %v313 = vadd.f32 0.0, %v312
    %v314 = vpop.f32.mrf.mxu0
    %v315 = vpop.f32.mrf.mxu0
    %316 = vdwg.mxu0
    %v317 = vadd.f32 %v230, %v311
    %v318 = vadd.f32 %v231, %v313
    %v319 = vxor.u32 %v317, 2147483648
    %v320 = vxor.u32 %v318, 2147483648
    %v321 = vmul.f32 %v319, 1.442695
    %v322 = vpow.pop %v321
    %v323 = vmul.f32 %v320, 1.442695
    %v324 = vpow.pop %v323
    %v325 = vadd.f32 %v322, 1.0
    %v326 = vadd.f32 %v324, 1.0
    %v327 = vrcp.pop %v325
    %v328 = vmul.f32 1.0, %v327
    %v329 = vrcp.pop %v326
    %v330 = vmul.f32 1.0, %v329
    %v331 = vmul.f32 %v330, 2.0
    %v332 = vsub.f32 %v331, 1.0
    %v333 = vmul.f32 %v328, 0.0
    %v334 = vmul.f32 %v328, %v332
    %336 = vrot.lane.b32.xlu0 %v334, 64
    %v337 = vpop.permute.xlu0 %336
    %v339 = vadd.f32 %v333, %v337
    %v340 = vtanh.pop %v339
    %v341 = vmul.f32 %v330, %v340
    %v342 = vpack.c.bf16 %v341, %v341
    %v344 = vunpack.c.l.b16 %v342
    %v345 = vpack.c.b16 %v344, %v344
    %346 = vrot.lane.b32.xlu0 %v345, 64
    %v347 = vpop.permute.xlu0 %346
    %vm349 = vcmask 257024
    %350 = vst.msk [vmem:[#allocation3] sm:$0xf] %vm349, %v347
    %s351 = scalar_lea.vmem [#allocation3], 28
    %vm352 = vcmask 519424
    %353 = vst.msk [vmem:[%s351] sm:$0xf] %vm352, %v347
    %s354 = smul.u32 1, 2
    %s355 = smul.addr %s354, 8
    %s356 = scalar_lea.vmem [#allocation2], %s355
    %v357 = vld [vmem:[%s356] sm:$0xff]
    %v358 = vld [vmem:[%s356 + $0x8] sm:$0xff]
    %359 = vrot.lane.b32.xlu0 %v342, 64
    %v360 = vpop.permute.xlu0 %359
    %v362 = vsel %vm272, %v360, 0
    %364 = vmatprep.subr.bf16.mxu0 0
    %365 = vmatpush1.bf16.msra.mxu0 0
    %366 = vmatprep.subr.bf16.mxu0 0
    %367 = vmatpush1.bf16.msra.mxu0 0
    %368 = vmatprep.subr.bf16.mxu0 0
    %369 = vmatpush1.bf16.msra.mxu0 0
    %370 = vmatprep.subr.bf16.mxu0 0
    %371 = vmatpush1.bf16.msra.mxu0 0
    %372 = vmatprep.subr.bf16.mxu0 %v263
    %373 = vmatpush1.bf16.msra.mxu0 %v262
    %374 = vmatprep.subr.bf16.mxu0 %v261
    %375 = vmatpush1.bf16.msra.mxu0 %v260
    %376 = vmatprep.subr.bf16.mxu0 %v259
    %377 = vmatpush1.bf16.msra.mxu0 %v258
    %378 = vmatprep.subr.bf16.mxu0 %v257
    %379 = vmatpush1.bf16.msra.mxu0 %v256
    %380 = vmatprep.subr.bf16.mxu0 0
    %381 = vmatpush2.bf16.msra.mxu0 0
    %382 = vmatprep.subr.bf16.mxu0 0
    %383 = vmatpush2.bf16.msra.mxu0 0
    %384 = vmatprep.subr.bf16.mxu0 0
    %385 = vmatpush2.bf16.msra.mxu0 0
    %386 = vmatprep.subr.bf16.mxu0 0
    %387 = vmatpush2.bf16.msra.mxu0 0
    %388 = vmatprep.subr.bf16.mxu0 0
    %389 = vmatpush2.bf16.msra.mxu0 0
    %390 = vmatprep.subr.bf16.mxu0 0
    %391 = vmatpush2.bf16.msra.mxu0 0
    %392 = vmatprep.subr.bf16.mxu0 0
    %393 = vmatpush2.bf16.msra.mxu0 0
    %394 = vmatprep.subr.bf16.mxu0 0
    %395 = vmatpush2.bf16.msra.mxu0 0
    %396 = vmatprep.mubr.bf16.mxu0 0
    %397 = vmatmul.mubr.bf16.gmra.mxu0 %v362
    %v398 = vpop.f32.mrf.mxu0
    %v399 = vadd.f32 0.0, %v398
    %v400 = vpop.f32.mrf.mxu0
    %v401 = vadd.f32 0.0, %v400
    %v402 = vpop.f32.mrf.mxu0
    %v403 = vpop.f32.mrf.mxu0
    %404 = vdwg.mxu0
    %v405 = vadd.f32 %v357, %v399
    %v406 = vadd.f32 %v358, %v401
    %v407 = vxor.u32 %v405, 2147483648
    %v408 = vxor.u32 %v406, 2147483648
    %v409 = vmul.f32 %v407, 1.442695
    %v410 = vpow.pop %v409
    %v411 = vmul.f32 %v408, 1.442695
    %v412 = vpow.pop %v411
    %v413 = vadd.f32 %v410, 1.0
    %v414 = vadd.f32 %v412, 1.0
    %v415 = vrcp.pop %v413
    %v416 = vmul.f32 1.0, %v415
    %v417 = vrcp.pop %v414
    %v418 = vmul.f32 1.0, %v417
    %v419 = vmul.f32 %v418, 2.0
    %v420 = vsub.f32 %v419, 1.0
    %v421 = vmul.f32 %v416, %v339
    %v422 = vmul.f32 %v416, %v420
    %424 = vrot.lane.b32.xlu0 %v422, 64
    %v425 = vpop.permute.xlu0 %424
    %v427 = vadd.f32 %v421, %v425
    %v428 = vtanh.pop %v427
    %v429 = vmul.f32 %v418, %v428
    %v430 = vpack.c.bf16 %v429, %v429
    %v432 = vunpack.c.l.b16 %v430
    %v433 = vpack.c.b16 %v432, %v432
    %434 = vrot.lane.b32.xlu0 %v433, 64
    %v435 = vpop.permute.xlu0 %434
    %s437 = scalar_lea.vmem [#allocation3], 4
    %438 = vst.msk [vmem:[%s437] sm:$0xf] %vm349, %v435
    %s439 = scalar_lea.vmem [#allocation3], 24
    %440 = vst.msk [vmem:[%s439] sm:$0xf] %vm352, %v435
    %s441 = smul.u32 2, 2
    %s442 = smul.addr %s441, 8
    %s443 = scalar_lea.vmem [#allocation2], %s442
    %v444 = vld [vmem:[%s443] sm:$0xff]
    %v445 = vld [vmem:[%s443 + $0x8] sm:$0xff]
    %446 = vrot.lane.b32.xlu0 %v430, 64
    %v447 = vpop.permute.xlu0 %446
    %v449 = vsel %vm272, %v447, 0
    %451 = vmatprep.subr.bf16.mxu0 0
    %452 = vmatpush1.bf16.msra.mxu0 0
    %453 = vmatprep.subr.bf16.mxu0 0
    %454 = vmatpush1.bf16.msra.mxu0 0
    %455 = vmatprep.subr.bf16.mxu0 0
    %456 = vmatpush1.bf16.msra.mxu0 0
    %457 = vmatprep.subr.bf16.mxu0 0
    %458 = vmatpush1.bf16.msra.mxu0 0
    %459 = vmatprep.subr.bf16.mxu0 %v263
    %460 = vmatpush1.bf16.msra.mxu0 %v262
    %461 = vmatprep.subr.bf16.mxu0 %v261
    %462 = vmatpush1.bf16.msra.mxu0 %v260
    %463 = vmatprep.subr.bf16.mxu0 %v259
    %464 = vmatpush1.bf16.msra.mxu0 %v258
    %465 = vmatprep.subr.bf16.mxu0 %v257
    %466 = vmatpush1.bf16.msra.mxu0 %v256
    %467 = vmatprep.subr.bf16.mxu0 0
    %468 = vmatpush2.bf16.msra.mxu0 0
    %469 = vmatprep.subr.bf16.mxu0 0
    %470 = vmatpush2.bf16.msra.mxu0 0
    %471 = vmatprep.subr.bf16.mxu0 0
    %472 = vmatpush2.bf16.msra.mxu0 0
    %473 = vmatprep.subr.bf16.mxu0 0
    %474 = vmatpush2.bf16.msra.mxu0 0
    %475 = vmatprep.subr.bf16.mxu0 0
    %476 = vmatpush2.bf16.msra.mxu0 0
    %477 = vmatprep.subr.bf16.mxu0 0
    %478 = vmatpush2.bf16.msra.mxu0 0
    %479 = vmatprep.subr.bf16.mxu0 0
    %480 = vmatpush2.bf16.msra.mxu0 0
    %481 = vmatprep.subr.bf16.mxu0 0
    %482 = vmatpush2.bf16.msra.mxu0 0
    %483 = vmatprep.mubr.bf16.mxu0 0
    %484 = vmatmul.mubr.bf16.gmra.mxu0 %v449
    %v485 = vpop.f32.mrf.mxu0
    %v486 = vadd.f32 0.0, %v485
    %v487 = vpop.f32.mrf.mxu0
    %v488 = vadd.f32 0.0, %v487
    %v489 = vpop.f32.mrf.mxu0
    %v490 = vpop.f32.mrf.mxu0
    %491 = vdwg.mxu0
    %v492 = vadd.f32 %v444, %v486
    %v493 = vadd.f32 %v445, %v488
    %v494 = vxor.u32 %v492, 2147483648
    %v495 = vxor.u32 %v493, 2147483648
    %v496 = vmul.f32 %v494, 1.442695
    %v497 = vpow.pop %v496
    %v498 = vmul.f32 %v495, 1.442695
    %v499 = vpow.pop %v498
    %v500 = vadd.f32 %v497, 1.0
    %v501 = vadd.f32 %v499, 1.0
    %v502 = vrcp.pop %v500
    %v503 = vmul.f32 1.0, %v502
    %v504 = vrcp.pop %v501
    %v505 = vmul.f32 1.0, %v504
    %v506 = vmul.f32 %v505, 2.0
    %v507 = vsub.f32 %v506, 1.0
    %v508 = vmul.f32 %v503, %v427
    %v509 = vmul.f32 %v503, %v507
    %511 = vrot.lane.b32.xlu0 %v509, 64
    %v512 = vpop.permute.xlu0 %511
    %v514 = vadd.f32 %v508, %v512
    %v515 = vtanh.pop %v514
    %v516 = vmul.f32 %v505, %v515
    %v517 = vpack.c.bf16 %v516, %v516
    %v519 = vunpack.c.l.b16 %v517
    %v520 = vpack.c.b16 %v519, %v519
    %521 = vrot.lane.b32.xlu0 %v520, 64
    %v522 = vpop.permute.xlu0 %521
    %s524 = scalar_lea.vmem [#allocation3], 8
    %525 = vst.msk [vmem:[%s524] sm:$0xf] %vm349, %v522
    %s526 = scalar_lea.vmem [#allocation3], 20
    %527 = vst.msk [vmem:[%s526] sm:$0xf] %vm352, %v522
    %s528 = smul.u32 3, 2
    %s529 = smul.addr %s528, 8
    %s530 = scalar_lea.vmem [#allocation2], %s529
    %v531 = vld [vmem:[%s530] sm:$0xff]
    %v532 = vld [vmem:[%s530 + $0x8] sm:$0xff]
    %533 = vrot.lane.b32.xlu0 %v517, 64
    %v534 = vpop.permute.xlu0 %533
    %v536 = vsel %vm272, %v534, 0
    %538 = vmatprep.subr.bf16.mxu0 0
    %539 = vmatpush1.bf16.msra.mxu0 0
    %540 = vmatprep.subr.bf16.mxu0 0
    %541 = vmatpush1.bf16.msra.mxu0 0
    %542 = vmatprep.subr.bf16.mxu0 0
    %543 = vmatpush1.bf16.msra.mxu0 0
    %544 = vmatprep.subr.bf16.mxu0 0
    %545 = vmatpush1.bf16.msra.mxu0 0
    %546 = vmatprep.subr.bf16.mxu0 %v263
    %547 = vmatpush1.bf16.msra.mxu0 %v262
    %548 = vmatprep.subr.bf16.mxu0 %v261
    %549 = vmatpush1.bf16.msra.mxu0 %v260
    %550 = vmatprep.subr.bf16.mxu0 %v259
    %551 = vmatpush1.bf16.msra.mxu0 %v258
    %552 = vmatprep.subr.bf16.mxu0 %v257
    %553 = vmatpush1.bf16.msra.mxu0 %v256
    %554 = vmatprep.subr.bf16.mxu0 0
    %555 = vmatpush2.bf16.msra.mxu0 0
    %556 = vmatprep.subr.bf16.mxu0 0
    %557 = vmatpush2.bf16.msra.mxu0 0
    %558 = vmatprep.subr.bf16.mxu0 0
    %559 = vmatpush2.bf16.msra.mxu0 0
    %560 = vmatprep.subr.bf16.mxu0 0
    %561 = vmatpush2.bf16.msra.mxu0 0
    %562 = vmatprep.subr.bf16.mxu0 0
    %563 = vmatpush2.bf16.msra.mxu0 0
    %564 = vmatprep.subr.bf16.mxu0 0
    %565 = vmatpush2.bf16.msra.mxu0 0
    %566 = vmatprep.subr.bf16.mxu0 0
    %567 = vmatpush2.bf16.msra.mxu0 0
    %568 = vmatprep.subr.bf16.mxu0 0
    %569 = vmatpush2.bf16.msra.mxu0 0
    %570 = vmatprep.mubr.bf16.mxu0 0
    %571 = vmatmul.mubr.bf16.gmra.mxu0 %v536
    %v572 = vpop.f32.mrf.mxu0
    %v573 = vadd.f32 0.0, %v572
    %v574 = vpop.f32.mrf.mxu0
    %v575 = vadd.f32 0.0, %v574
    %v576 = vpop.f32.mrf.mxu0
    %v577 = vpop.f32.mrf.mxu0
    %578 = vdwg.mxu0
    %v579 = vadd.f32 %v531, %v573
    %v580 = vadd.f32 %v532, %v575
    %v581 = vxor.u32 %v579, 2147483648
    %v582 = vxor.u32 %v580, 2147483648
    %v583 = vmul.f32 %v581, 1.442695
    %v584 = vpow.pop %v583
    %v585 = vmul.f32 %v582, 1.442695
    %v586 = vpow.pop %v585
    %v587 = vadd.f32 %v584, 1.0
    %v588 = vadd.f32 %v586, 1.0
    %v589 = vrcp.pop %v587
    %v590 = vmul.f32 1.0, %v589
    %v591 = vrcp.pop %v588
    %v592 = vmul.f32 1.0, %v591
    %v593 = vmul.f32 %v592, 2.0
    %v594 = vsub.f32 %v593, 1.0
    %v595 = vmul.f32 %v590, %v514
    %v596 = vmul.f32 %v590, %v594
    %598 = vrot.lane.b32.xlu0 %v596, 64
    %v599 = vpop.permute.xlu0 %598
    %v601 = vadd.f32 %v595, %v599
    %v602 = vtanh.pop %v601
    %v603 = vmul.f32 %v592, %v602
    %v604 = vpack.c.bf16 %v603, %v603
    %v606 = vunpack.c.l.b16 %v604
    %v607 = vpack.c.b16 %v606, %v606
    %608 = vrot.lane.b32.xlu0 %v607, 64
    %v609 = vpop.permute.xlu0 %608
    %s611 = scalar_lea.vmem [#allocation3], 12
    %612 = vst.msk [vmem:[%s611] sm:$0xf] %vm349, %v609
    %s613 = scalar_lea.vmem [#allocation3], 16
    %614 = vst.msk [vmem:[%s613] sm:$0xf] %vm352, %v609
    %s615 = smul.u32 4, 2
    %s616 = smul.addr %s615, 8
    %s617 = scalar_lea.vmem [#allocation2], %s616
    %v618 = vld [vmem:[%s617] sm:$0xff]
    %v619 = vld [vmem:[%s617 + $0x8] sm:$0xff]
    %620 = vrot.lane.b32.xlu0 %v604, 64
    %v621 = vpop.permute.xlu0 %620
    %v623 = vsel %vm272, %v621, 0
    %625 = vmatprep.subr.bf16.mxu0 0
    %626 = vmatpush1.bf16.msra.mxu0 0
    %627 = vmatprep.subr.bf16.mxu0 0
    %628 = vmatpush1.bf16.msra.mxu0 0
    %629 = vmatprep.subr.bf16.mxu0 0
    %630 = vmatpush1.bf16.msra.mxu0 0
    %631 = vmatprep.subr.bf16.mxu0 0
    %632 = vmatpush1.bf16.msra.mxu0 0
    %633 = vmatprep.subr.bf16.mxu0 %v263
    %634 = vmatpush1.bf16.msra.mxu0 %v262
    %635 = vmatprep.subr.bf16.mxu0 %v261
    %636 = vmatpush1.bf16.msra.mxu0 %v260
    %637 = vmatprep.subr.bf16.mxu0 %v259
    %638 = vmatpush1.bf16.msra.mxu0 %v258
    %639 = vmatprep.subr.bf16.mxu0 %v257
    %640 = vmatpush1.bf16.msra.mxu0 %v256
    %641 = vmatprep.subr.bf16.mxu0 0
    %642 = vmatpush2.bf16.msra.mxu0 0
    %643 = vmatprep.subr.bf16.mxu0 0
    %644 = vmatpush2.bf16.msra.mxu0 0
    %645 = vmatprep.subr.bf16.mxu0 0
    %646 = vmatpush2.bf16.msra.mxu0 0
    %647 = vmatprep.subr.bf16.mxu0 0
    %648 = vmatpush2.bf16.msra.mxu0 0
    %649 = vmatprep.subr.bf16.mxu0 0
    %650 = vmatpush2.bf16.msra.mxu0 0
    %651 = vmatprep.subr.bf16.mxu0 0
    %652 = vmatpush2.bf16.msra.mxu0 0
    %653 = vmatprep.subr.bf16.mxu0 0
    %654 = vmatpush2.bf16.msra.mxu0 0
    %655 = vmatprep.subr.bf16.mxu0 0
    %656 = vmatpush2.bf16.msra.mxu0 0
    %657 = vmatprep.mubr.bf16.mxu0 0
    %658 = vmatmul.mubr.bf16.gmra.mxu0 %v623
    %v659 = vpop.f32.mrf.mxu0
    %v660 = vadd.f32 0.0, %v659
    %v661 = vpop.f32.mrf.mxu0
    %v662 = vadd.f32 0.0, %v661
    %v663 = vpop.f32.mrf.mxu0
    %v664 = vpop.f32.mrf.mxu0
    %665 = vdwg.mxu0
    %v666 = vadd.f32 %v618, %v660
    %v667 = vadd.f32 %v619, %v662
    %v668 = vxor.u32 %v666, 2147483648
    %v669 = vxor.u32 %v667, 2147483648
    %v670 = vmul.f32 %v668, 1.442695
    %v671 = vpow.pop %v670
    %v672 = vmul.f32 %v669, 1.442695
    %v673 = vpow.pop %v672
    %v674 = vadd.f32 %v671, 1.0
    %v675 = vadd.f32 %v673, 1.0
    %v676 = vrcp.pop %v674
    %v677 = vmul.f32 1.0, %v676
    %v678 = vrcp.pop %v675
    %v679 = vmul.f32 1.0, %v678
    %v680 = vmul.f32 %v679, 2.0
    %v681 = vsub.f32 %v680, 1.0
    %v682 = vmul.f32 %v677, %v601
    %v683 = vmul.f32 %v677, %v681
    %685 = vrot.lane.b32.xlu0 %v683, 64
    %v686 = vpop.permute.xlu0 %685
    %v688 = vadd.f32 %v682, %v686
    %v689 = vtanh.pop %v688
    %v690 = vmul.f32 %v679, %v689
    %v691 = vpack.c.bf16 %v690, %v690
    %v693 = vunpack.c.l.b16 %v691
    %v694 = vpack.c.b16 %v693, %v693
    %695 = vrot.lane.b32.xlu0 %v694, 64
    %v696 = vpop.permute.xlu0 %695
    %698 = vst.msk [vmem:[%s613] sm:$0xf] %vm349, %v696
    %699 = vst.msk [vmem:[%s611] sm:$0xf] %vm352, %v696
    %s700 = smul.u32 5, 2
    %s701 = smul.addr %s700, 8
    %s702 = scalar_lea.vmem [#allocation2], %s701
    %v703 = vld [vmem:[%s702] sm:$0xff]
    %v704 = vld [vmem:[%s702 + $0x8] sm:$0xff]
    %705 = vrot.lane.b32.xlu0 %v691, 64
    %v706 = vpop.permute.xlu0 %705
    %v708 = vsel %vm272, %v706, 0
    %710 = vmatprep.subr.bf16.mxu0 0
    %711 = vmatpush1.bf16.msra.mxu0 0
    %712 = vmatprep.subr.bf16.mxu0 0
    %713 = vmatpush1.bf16.msra.mxu0 0
    %714 = vmatprep.subr.bf16.mxu0 0
    %715 = vmatpush1.bf16.msra.mxu0 0
    %716 = vmatprep.subr.bf16.mxu0 0
    %717 = vmatpush1.bf16.msra.mxu0 0
    %718 = vmatprep.subr.bf16.mxu0 %v263
    %719 = vmatpush1.bf16.msra.mxu0 %v262
    %720 = vmatprep.subr.bf16.mxu0 %v261
    %721 = vmatpush1.bf16.msra.mxu0 %v260
    %722 = vmatprep.subr.bf16.mxu0 %v259
    %723 = vmatpush1.bf16.msra.mxu0 %v258
    %724 = vmatprep.subr.bf16.mxu0 %v257
    %725 = vmatpush1.bf16.msra.mxu0 %v256
    %726 = vmatprep.subr.bf16.mxu0 0
    %727 = vmatpush2.bf16.msra.mxu0 0
    %728 = vmatprep.subr.bf16.mxu0 0
    %729 = vmatpush2.bf16.msra.mxu0 0
    %730 = vmatprep.subr.bf16.mxu0 0
    %731 = vmatpush2.bf16.msra.mxu0 0
    %732 = vmatprep.subr.bf16.mxu0 0
    %733 = vmatpush2.bf16.msra.mxu0 0
    %734 = vmatprep.subr.bf16.mxu0 0
    %735 = vmatpush2.bf16.msra.mxu0 0
    %736 = vmatprep.subr.bf16.mxu0 0
    %737 = vmatpush2.bf16.msra.mxu0 0
    %738 = vmatprep.subr.bf16.mxu0 0
    %739 = vmatpush2.bf16.msra.mxu0 0
    %740 = vmatprep.subr.bf16.mxu0 0
    %741 = vmatpush2.bf16.msra.mxu0 0
    %742 = vmatprep.mubr.bf16.mxu0 0
    %743 = vmatmul.mubr.bf16.gmra.mxu0 %v708
    %v744 = vpop.f32.mrf.mxu0
    %v745 = vadd.f32 0.0, %v744
    %v746 = vpop.f32.mrf.mxu0
    %v747 = vadd.f32 0.0, %v746
    %v748 = vpop.f32.mrf.mxu0
    %v749 = vpop.f32.mrf.mxu0
    %750 = vdwg.mxu0
    %v751 = vadd.f32 %v703, %v745
    %v752 = vadd.f32 %v704, %v747
    %v753 = vxor.u32 %v751, 2147483648
    %v754 = vxor.u32 %v752, 2147483648
    %v755 = vmul.f32 %v753, 1.442695
    %v756 = vpow.pop %v755
    %v757 = vmul.f32 %v754, 1.442695
    %v758 = vpow.pop %v757
    %v759 = vadd.f32 %v756, 1.0
    %v760 = vadd.f32 %v758, 1.0
    %v761 = vrcp.pop %v759
    %v762 = vmul.f32 1.0, %v761
    %v763 = vrcp.pop %v760
    %v764 = vmul.f32 1.0, %v763
    %v765 = vmul.f32 %v764, 2.0
    %v766 = vsub.f32 %v765, 1.0
    %v767 = vmul.f32 %v762, %v688
    %v768 = vmul.f32 %v762, %v766
    %770 = vrot.lane.b32.xlu0 %v768, 64
    %v771 = vpop.permute.xlu0 %770
    %v773 = vadd.f32 %v767, %v771
    %v774 = vtanh.pop %v773
    %v775 = vmul.f32 %v764, %v774
    %v776 = vpack.c.bf16 %v775, %v775
    %v778 = vunpack.c.l.b16 %v776
    %v779 = vpack.c.b16 %v778, %v778
    %780 = vrot.lane.b32.xlu0 %v779, 64
    %v781 = vpop.permute.xlu0 %780
    %783 = vst.msk [vmem:[%s526] sm:$0xf] %vm349, %v781
    %784 = vst.msk [vmem:[%s524] sm:$0xf] %vm352, %v781
    %s785 = smul.u32 6, 2
    %s786 = smul.addr %s785, 8
    %s787 = scalar_lea.vmem [#allocation2], %s786
    %v788 = vld [vmem:[%s787] sm:$0xff]
    %v789 = vld [vmem:[%s787 + $0x8] sm:$0xff]
    %790 = vrot.lane.b32.xlu0 %v776, 64
    %v791 = vpop.permute.xlu0 %790
    %v793 = vsel %vm272, %v791, 0
    %795 = vmatprep.subr.bf16.mxu0 0
    %796 = vmatpush1.bf16.msra.mxu0 0
    %797 = vmatprep.subr.bf16.mxu0 0
    %798 = vmatpush1.bf16.msra.mxu0 0
    %799 = vmatprep.subr.bf16.mxu0 0
    %800 = vmatpush1.bf16.msra.mxu0 0
    %801 = vmatprep.subr.bf16.mxu0 0
    %802 = vmatpush1.bf16.msra.mxu0 0
    %803 = vmatprep.subr.bf16.mxu0 %v263
    %804 = vmatpush1.bf16.msra.mxu0 %v262
    %805 = vmatprep.subr.bf16.mxu0 %v261
    %806 = vmatpush1.bf16.msra.mxu0 %v260
    %807 = vmatprep.subr.bf16.mxu0 %v259
    %808 = vmatpush1.bf16.msra.mxu0 %v258
    %809 = vmatprep.subr.bf16.mxu0 %v257
    %810 = vmatpush1.bf16.msra.mxu0 %v256
    %811 = vmatprep.subr.bf16.mxu0 0
    %812 = vmatpush2.bf16.msra.mxu0 0
    %813 = vmatprep.subr.bf16.mxu0 0
    %814 = vmatpush2.bf16.msra.mxu0 0
    %815 = vmatprep.subr.bf16.mxu0 0
    %816 = vmatpush2.bf16.msra.mxu0 0
    %817 = vmatprep.subr.bf16.mxu0 0
    %818 = vmatpush2.bf16.msra.mxu0 0
    %819 = vmatprep.subr.bf16.mxu0 0
    %820 = vmatpush2.bf16.msra.mxu0 0
    %821 = vmatprep.subr.bf16.mxu0 0
    %822 = vmatpush2.bf16.msra.mxu0 0
    %823 = vmatprep.subr.bf16.mxu0 0
    %824 = vmatpush2.bf16.msra.mxu0 0
    %825 = vmatprep.subr.bf16.mxu0 0
    %826 = vmatpush2.bf16.msra.mxu0 0
    %827 = vmatprep.mubr.bf16.mxu0 0
    %828 = vmatmul.mubr.bf16.gmra.mxu0 %v793
    %v829 = vpop.f32.mrf.mxu0
    %v830 = vadd.f32 0.0, %v829
    %v831 = vpop.f32.mrf.mxu0
    %v832 = vadd.f32 0.0, %v831
    %v833 = vpop.f32.mrf.mxu0
    %v834 = vpop.f32.mrf.mxu0
    %835 = vdwg.mxu0
    %v836 = vadd.f32 %v788, %v830
    %v837 = vadd.f32 %v789, %v832
    %v838 = vxor.u32 %v836, 2147483648
    %v839 = vxor.u32 %v837, 2147483648
    %v840 = vmul.f32 %v838, 1.442695
    %v841 = vpow.pop %v840
    %v842 = vmul.f32 %v839, 1.442695
    %v843 = vpow.pop %v842
    %v844 = vadd.f32 %v841, 1.0
    %v845 = vadd.f32 %v843, 1.0
    %v846 = vrcp.pop %v844
    %v847 = vmul.f32 1.0, %v846
    %v848 = vrcp.pop %v845
    %v849 = vmul.f32 1.0, %v848
    %v850 = vmul.f32 %v849, 2.0
    %v851 = vsub.f32 %v850, 1.0
    %v852 = vmul.f32 %v847, %v773
    %v853 = vmul.f32 %v847, %v851
    %855 = vrot.lane.b32.xlu0 %v853, 64
    %v856 = vpop.permute.xlu0 %855
    %v858 = vadd.f32 %v852, %v856
    %v859 = vtanh.pop %v858
    %v860 = vmul.f32 %v849, %v859
    %v861 = vpack.c.bf16 %v860, %v860
    %v863 = vunpack.c.l.b16 %v861
    %v864 = vpack.c.b16 %v863, %v863
    %865 = vrot.lane.b32.xlu0 %v864, 64
    %v866 = vpop.permute.xlu0 %865
    %868 = vst.msk [vmem:[%s439] sm:$0xf] %vm349, %v866
    %869 = vst.msk [vmem:[%s437] sm:$0xf] %vm352, %v866
    %s870 = smul.u32 7, 2
    %s871 = smul.addr %s870, 8
    %s872 = scalar_lea.vmem [#allocation2], %s871
    %v873 = vld [vmem:[%s872] sm:$0xff]
    %v874 = vld [vmem:[%s872 + $0x8] sm:$0xff]
    %875 = vrot.lane.b32.xlu0 %v861, 64
    %v876 = vpop.permute.xlu0 %875
    %v878 = vsel %vm272, %v876, 0
    %880 = vmatprep.subr.bf16.mxu0 0
    %881 = vmatpush1.bf16.msra.mxu0 0
    %882 = vmatprep.subr.bf16.mxu0 0
    %883 = vmatpush1.bf16.msra.mxu0 0
    %884 = vmatprep.subr.bf16.mxu0 0
    %885 = vmatpush1.bf16.msra.mxu0 0
    %886 = vmatprep.subr.bf16.mxu0 0
    %887 = vmatpush1.bf16.msra.mxu0 0
    %888 = vmatprep.subr.bf16.mxu0 %v263
    %889 = vmatpush1.bf16.msra.mxu0 %v262
    %890 = vmatprep.subr.bf16.mxu0 %v261
    %891 = vmatpush1.bf16.msra.mxu0 %v260
    %892 = vmatprep.subr.bf16.mxu0 %v259
    %893 = vmatpush1.bf16.msra.mxu0 %v258
    %894 = vmatprep.subr.bf16.mxu0 %v257
    %895 = vmatpush1.bf16.msra.mxu0 %v256
    %896 = vmatprep.subr.bf16.mxu0 0
    %897 = vmatpush2.bf16.msra.mxu0 0
    %898 = vmatprep.subr.bf16.mxu0 0
    %899 = vmatpush2.bf16.msra.mxu0 0
    %900 = vmatprep.subr.bf16.mxu0 0
    %901 = vmatpush2.bf16.msra.mxu0 0
    %902 = vmatprep.subr.bf16.mxu0 0
    %903 = vmatpush2.bf16.msra.mxu0 0
    %904 = vmatprep.subr.bf16.mxu0 0
    %905 = vmatpush2.bf16.msra.mxu0 0
    %906 = vmatprep.subr.bf16.mxu0 0
    %907 = vmatpush2.bf16.msra.mxu0 0
    %908 = vmatprep.subr.bf16.mxu0 0
    %909 = vmatpush2.bf16.msra.mxu0 0
    %910 = vmatprep.subr.bf16.mxu0 0
    %911 = vmatpush2.bf16.msra.mxu0 0
    %912 = vmatprep.mubr.bf16.mxu0 0
    %913 = vmatmul.mubr.bf16.gmra.mxu0 %v878
    %v914 = vpop.f32.mrf.mxu0
    %v915 = vadd.f32 0.0, %v914
    %v916 = vpop.f32.mrf.mxu0
    %v917 = vadd.f32 0.0, %v916
    %v918 = vpop.f32.mrf.mxu0
    %v919 = vpop.f32.mrf.mxu0
    %920 = vdwg.mxu0
    %v921 = vadd.f32 %v873, %v915
    %v922 = vadd.f32 %v874, %v917
    %v923 = vxor.u32 %v921, 2147483648
    %v924 = vxor.u32 %v922, 2147483648
    %v925 = vmul.f32 %v923, 1.442695
    %v926 = vpow.pop %v925
    %v927 = vmul.f32 %v924, 1.442695
    %v928 = vpow.pop %v927
    %v929 = vadd.f32 %v926, 1.0
    %v930 = vadd.f32 %v928, 1.0
    %v931 = vrcp.pop %v929
    %v932 = vmul.f32 1.0, %v931
    %v933 = vrcp.pop %v930
    %v934 = vmul.f32 1.0, %v933
    %v935 = vmul.f32 %v934, 2.0
    %v936 = vsub.f32 %v935, 1.0
    %v937 = vmul.f32 %v932, %v858
    %v938 = vmul.f32 %v932, %v936
    %940 = vrot.lane.b32.xlu0 %v938, 64
    %v941 = vpop.permute.xlu0 %940
    %v943 = vadd.f32 %v937, %v941
    %v944 = vtanh.pop %v943
    %v945 = vmul.f32 %v934, %v944
    %v946 = vpack.c.bf16 %v945, %v945
    %v948 = vunpack.c.l.b16 %v946
    %v949 = vpack.c.b16 %v948, %v948
    %950 = vrot.lane.b32.xlu0 %v949, 64
    %v951 = vpop.permute.xlu0 %950
    %953 = vst.msk [vmem:[%s351] sm:$0xf] %vm349, %v951
    %954 = vst.msk [vmem:[#allocation3] sm:$0xf] %vm352, %v951
    %v955 = vld [vmem:[#allocation3] sm:$0xf]
    %v956 = vld [vmem:[#allocation3 + $0x4] sm:$0xf]
    %v957 = vld [vmem:[#allocation3 + $0x8] sm:$0xf]
    %v958 = vld [vmem:[#allocation3 + $0xc] sm:$0xf]
    %v959 = vld [vmem:[#allocation3 + $0x10] sm:$0xf]
    %v960 = vld [vmem:[#allocation3 + $0x14] sm:$0xf]
    %v961 = vld [vmem:[#allocation3 + $0x18] sm:$0xf]
    %v962 = vld [vmem:[#allocation3 + $0x1c] sm:$0xf]
    %v963 = vld [vmem:[#allocation7] sm:$0xf]
    %v964 = vld [vmem:[#allocation7 + $0x4] sm:$0xf]
    %v965 = vld [vmem:[#allocation7 + $0x8] sm:$0xf]
    %v966 = vld [vmem:[#allocation7 + $0xc] sm:$0xf]
    %v967 = vld [vmem:[#allocation7 + $0x10] sm:$0xf]
    %v968 = vld [vmem:[#allocation7 + $0x14] sm:$0xf]
    %v969 = vld [vmem:[#allocation7 + $0x18] sm:$0xf]
    %v970 = vld [vmem:[#allocation7 + $0x1c] sm:$0xf]
    %v971 = vld [vmem:[%s5] sm:$0x1]
    %v973 = vlaneseq
    %v974 = vshrl.u32 %v973, 7
    %v975 = vsub.s32 0, %v974
    %v976 = vrot.slane %v971, %v975
    %v986 = vunpack.c.l.b16 %v955
    %v987 = vunpack.c.l.b16 %v956
    %v988 = vunpack.c.l.b16 %v957
    %v989 = vunpack.c.l.b16 %v958
    %v990 = vunpack.c.l.b16 %v959
    %v991 = vunpack.c.l.b16 %v960
    %v992 = vunpack.c.l.b16 %v961
    %v993 = vunpack.c.l.b16 %v962
    %v994 = vpack.c.b16 %v987, %v986
    %v995 = vpack.c.b16 %v989, %v988
    %v996 = vpack.c.b16 %v991, %v990
    %v997 = vpack.c.b16 %v993, %v992
    %v1006 = vunpack.c.l.b16 %v963
    %v1007 = vunpack.c.l.b16 %v964
    %v1008 = vunpack.c.l.b16 %v965
    %v1009 = vunpack.c.l.b16 %v966
    %v1010 = vunpack.c.l.b16 %v967
    %v1011 = vunpack.c.l.b16 %v968
    %v1012 = vunpack.c.l.b16 %v969
    %v1013 = vunpack.c.l.b16 %v970
    %v1014 = vpack.c.b16 %v1007, %v1006
    %v1015 = vpack.c.b16 %v1009, %v1008
    %v1016 = vpack.c.b16 %v1011, %v1010
    %v1017 = vpack.c.b16 %v1013, %v1012
    %v1023 = vsel %vm272, %v994, 0
    %v1026 = vsel %vm272, %v995, 0
    %v1029 = vsel %vm272, %v996, 0
    %v1032 = vsel %vm272, %v997, 0
    %1034 = vmatprep.subr.bf16.mxu0 0
    %1035 = vmatpush1.bf16.msra.mxu0 0
    %1036 = vmatprep.subr.bf16.mxu0 0
    %1037 = vmatpush1.bf16.msra.mxu0 0
    %1038 = vmatprep.subr.bf16.mxu0 0
    %1039 = vmatpush1.bf16.msra.mxu0 0
    %1040 = vmatprep.subr.bf16.mxu0 0
    %1041 = vmatpush1.bf16.msra.mxu0 0
    %1042 = vmatprep.subr.bf16.mxu0 0
    %1043 = vmatpush1.bf16.msra.mxu0 %v1017
    %1044 = vmatprep.subr.bf16.mxu0 0
    %1045 = vmatpush1.bf16.msra.mxu0 %v1016
    %1046 = vmatprep.subr.bf16.mxu0 0
    %1047 = vmatpush1.bf16.msra.mxu0 %v1015
    %1048 = vmatprep.subr.bf16.mxu0 0
    %1049 = vmatpush1.bf16.msra.mxu0 %v1014
    %1050 = vmatprep.subr.bf16.mxu0 0
    %1051 = vmatpush2.bf16.msra.mxu0 0
    %1052 = vmatprep.subr.bf16.mxu0 0
    %1053 = vmatpush2.bf16.msra.mxu0 0
    %1054 = vmatprep.subr.bf16.mxu0 0
    %1055 = vmatpush2.bf16.msra.mxu0 0
    %1056 = vmatprep.subr.bf16.mxu0 0
    %1057 = vmatpush2.bf16.msra.mxu0 0
    %1058 = vmatprep.subr.bf16.mxu0 0
    %1059 = vmatpush2.bf16.msra.mxu0 0
    %1060 = vmatprep.subr.bf16.mxu0 0
    %1061 = vmatpush2.bf16.msra.mxu0 0
    %1062 = vmatprep.subr.bf16.mxu0 0
    %1063 = vmatpush2.bf16.msra.mxu0 0
    %1064 = vmatprep.subr.bf16.mxu0 0
    %1065 = vmatpush2.bf16.msra.mxu0 0
    %1066 = vmatprep.mubr.bf16.mxu0 0
    %1067 = vmatmul.mubr.bf16.gmra.mxu0 %v1023
    %v1068 = vpop.f32.mrf.mxu0
    %v1069 = vadd.f32 %v976, %v1068
    %v1070 = vpop.f32.mrf.mxu0
    %v1071 = vpop.f32.mrf.mxu0
    %v1072 = vadd.f32 %v976, %v1071
    %v1073 = vpop.f32.mrf.mxu0
    %1074 = vmatprep.mubr.bf16.mxu0 0
    %1075 = vmatmul.mubr.bf16.gmra.mxu0 %v1026
    %v1076 = vpop.f32.mrf.mxu0
    %v1077 = vadd.f32 %v976, %v1076
    %v1078 = vpop.f32.mrf.mxu0
    %v1079 = vpop.f32.mrf.mxu0
    %v1080 = vadd.f32 %v976, %v1079
    %v1081 = vpop.f32.mrf.mxu0
    %1082 = vmatprep.mubr.bf16.mxu0 0
    %1083 = vmatmul.mubr.bf16.gmra.mxu0 %v1029
    %v1084 = vpop.f32.mrf.mxu0
    %v1085 = vadd.f32 %v976, %v1084
    %v1086 = vpop.f32.mrf.mxu0
    %v1087 = vpop.f32.mrf.mxu0
    %v1088 = vadd.f32 %v976, %v1087
    %v1089 = vpop.f32.mrf.mxu0
    %1090 = vmatprep.mubr.bf16.mxu0 0
    %1091 = vmatmul.mubr.bf16.gmra.mxu0 %v1032
    %v1092 = vpop.f32.mrf.mxu0
    %v1093 = vadd.f32 %v976, %v1092
    %v1094 = vpop.f32.mrf.mxu0
    %v1095 = vpop.f32.mrf.mxu0
    %v1096 = vadd.f32 %v976, %v1095
    %v1097 = vpop.f32.mrf.mxu0
    %1098 = vdwg.mxu0
    %1099 = vst [vmem:[#allocation9] sm:$0xff] %v1069
    %1100 = vst [vmem:[#allocation9 + $0x8] sm:$0xff] %v1072
    %1101 = vst [vmem:[#allocation9 + $0x10] sm:$0xff] %v1077
    %1102 = vst [vmem:[#allocation9 + $0x18] sm:$0xff] %v1080
    %1103 = vst [vmem:[#allocation9 + $0x20] sm:$0xff] %v1085
    %1104 = vst [vmem:[#allocation9 + $0x28] sm:$0xff] %v1088
    %1105 = vst [vmem:[#allocation9 + $0x30] sm:$0xff] %v1093
    %1106 = vst [vmem:[#allocation9 + $0x38] sm:$0xff] %v1096
    // Predicated region
    $region34: #{tpu_custom_call.1} parent=1 // pred_check
      _
    $region35: #{tpu_custom_call.1} parent=1 // pred_check_branch
      %1108 = sbr.rel (0) target = $region37
    $region36: #{tpu_custom_call.1} parent=1 // pred_region
      %s1110 = ssub.s32 1024, 1024
      %1111 = vsyncadd [#allocation6], %s1110
      %s1112 = sshll.u32 [#allocation9], 4
      %s1113 = int_to_ptr.vmem [resolvable:$true] %s1112
      %1118 = dma.vmem_to_hbm [thread:$0]  %s1113, 1024, %s6, [#allocation6], 128, 128, 8
    $region37: #{tpu_custom_call.1} parent=1 // pred_fallthru
      _
    // Predicated region
    $region38: #{tpu_custom_call.1} parent=1 // pred_check
      _
    $region39: #{tpu_custom_call.1} parent=1 // pred_check_branch
      %1120 = sbr.rel (0) target = $region41
    $region40: #{tpu_custom_call.1} parent=1 // pred_region
      %1121 = dma.done [#allocation6], 1024
    $region41: #{tpu_custom_call.1} parent=1 // pred_fallthru
      _
    %1122 = vsyncpa [#allocation5], 1
    %1123 = vsyncpa [#allocation8], 1
    %1124 = vsyncpa [#allocation6], 1

</llo_original>
